<compile_context>
chip_gen: v7x
topology: tpu7x:2x2x1
jax: 0.10.0
libtpu: 0.0.40
codegen_flags: <defaults>
</compile_context>

<pallas_src>
import jax
import jax.numpy as jnp
from jax import lax
from jax.experimental import pallas as pl
from jax.experimental.pallas import tpu as pltpu


# ---------------------------------------------------------------------------
# Fused kernel: one grid step == one batch element.
# ---------------------------------------------------------------------------
def _fused_kernel(x_ref, wa_ref, mb_ref, sh_ref, wc_ref, ws_ref,
                  m0h_ref, msh_ref, m1_ref, vw_ref, b64_ref, b256_ref, o_ref):
    dot = lambda a, b: jnp.dot(a, b, preferred_element_type=jnp.float32)

    x = x_ref[0]                 # (H, W*Cin)  lane-dense activation slab
    sh_m1 = sh_ref[0]            # (H, H) vertical shift: row h <- row h-1 ... wait, gives x[h-1]? see pack
    sh_p1 = sh_ref[1]            # picks x[h+1]
    sh_m2 = sh_ref[2]            # picks x[h-2]
    sh_p2 = sh_ref[3]            # picks x[h+2]
    vw = vw_ref[...]             # (6, W*C)  tiled per-channel vertical depthwise weights
    b64 = b64_ref[...]           # (2, W*Cin) folded biases (branch2a, branch2b)
    b256 = b256_ref[...]         # (7, W*C)   folded / conv biases

    # branch2a: 1x1 conv (+BN) + ReLU
    ya = jnp.maximum(dot(x, wa_ref[...]) + b64[0:1, :], 0.0)

    # branch2b: 3x3 conv (+BN) + ReLU
    # vertical taps via (H,H) shift matmuls; horizontal taps + channel mixing via
    # banded block matrices (one per ky). Zero padding is encoded in the matrices.
    yb = dot(ya, mb_ref[1])                               # ky = 0
    yb = yb + dot(dot(sh_m1, ya), mb_ref[0])              # ky = -1
    yb = yb + dot(dot(sh_p1, ya), mb_ref[2])              # ky = +1
    yb = jnp.maximum(yb + b64[1:2, :], 0.0)

    # branch2c: 1x1 conv 4->16 (+BN), no activation
    u = dot(yb, wc_ref[...]) + b256[0:1, :]

    # shortcut: 1x1 conv 4->16 (+BN) on the block input
    short = dot(x, ws_ref[...]) + b256[1:2, :]

    # LSKA (k_size=7): chained depthwise convs + 1x1 conv, then multiplicative gate
    a = dot(u, m0h_ref[...]) + b256[2:3, :]                               # conv0h (1,3) pad 1
    a = (dot(sh_m1, a) * vw[0:1, :] + a * vw[1:2, :]
         + dot(sh_p1, a) * vw[2:3, :] + b256[3:4, :])                     # conv0v (3,1) pad 1
    a = dot(a, msh_ref[...]) + b256[4:5, :]                               # spatial_h dil 2
    a = (dot(sh_m2, a) * vw[3:4, :] + a * vw[4:5, :]
         + dot(sh_p2, a) * vw[5:6, :] + b256[5:6, :])                     # spatial_v dil 2
    a = dot(a, m1_ref[...]) + b256[6:7, :]                                # conv1 (1x1)

    o_ref[0] = jnp.maximum(u * a + short, 0.0)


# ---------------------------------------------------------------------------
# Wrapper: single pallas_call, grid over batch, "parallel" semantics.
# ---------------------------------------------------------------------------
def _full_spec(arr):
    n = arr.ndim
    return pl.BlockSpec(arr.shape, lambda b: (0,) * n)


@jax.jit
def bottleneck_lska_forward(x_nchw, K):
    B, Cin, H, W = x_nchw.shape
    Cout = K['m1'].shape[0] // W
    x = jnp.transpose(x_nchw, (0, 2, 3, 1)).reshape(B, H, W * Cin)

    out = pl.pallas_call(
        _fused_kernel,
        grid=(B,),
        in_specs=[
            pl.BlockSpec((1, H, W * Cin), lambda b: (b, 0, 0)),
            _full_spec(K['wa']), _full_spec(K['mb']), _full_spec(K['sh']),
            _full_spec(K['wc']), _full_spec(K['ws']), _full_spec(K['m0h']),
            _full_spec(K['msh']), _full_spec(K['m1']), _full_spec(K['vw']),
            _full_spec(K['b64']), _full_spec(K['b256']),
        ],
        out_specs=pl.BlockSpec((1, H, W * Cout), lambda b: (b, 0, 0)),
        out_shape=jax.ShapeDtypeStruct((B, H, W * Cout), jnp.float32),
        compiler_params=pltpu.CompilerParams(dimension_semantics=("parallel",)),
    )(x, K['wa'], K['mb'], K['sh'], K['wc'], K['ws'],
      K['m0h'], K['msh'], K['m1'], K['vw'], K['b64'], K['b256'])

    out = out.reshape(B, H, W, Cout)
    return jnp.transpose(out, (0, 3, 1, 2))          # back to NCHW (module semantics)


# ---------------------------------------------------------------------------
# Host-side packing: fold BN and build the block/banded/shift matrices.
# ---------------------------------------------------------------------------
def pack_params(P, H, W):
    f32 = jnp.float32
    eye_w = jnp.eye(W, dtype=f32)

    def kron_block(wf):                      # 1x1 conv (Ci,Co) -> (W*Ci, W*Co)
        return jnp.kron(eye_w, wf.astype(f32))

    def tile_bias(b):                        # (Co,) -> (1, W*Co) interleaved layout
        return jnp.tile(b.astype(f32), W).reshape(1, -1)

    def dw_h_mat(w3, dil):                   # horizontal depthwise, taps at (-dil,0,+dil)
        m = jnp.zeros((W * w3.shape[1], W * w3.shape[1]), f32)
        for k, off in enumerate((-dil, 0, dil)):
            m = m + jnp.kron(jnp.eye(W, k=-off, dtype=f32), jnp.diag(w3[k]))
        return m

    a, b3, c, s, L = P['b2a'], P['b2b'], P['b2c'], P['short'], P['lska']

    wa = kron_block(a['w'] * a['scale'][None, :])
    wc = kron_block(c['w'] * c['scale'][None, :])
    ws = kron_block(s['w'] * s['scale'][None, :])

    # 3x3 conv: one banded block matrix per ky (offset ky-1), horizontal+channel mix
    wf3 = b3['w'] * b3['scale'][None, None, None, :]        # (3,3,Ci,Co), BN folded
    mb = []
    for kyi in range(3):
        m = jnp.zeros((W * wf3.shape[2], W * wf3.shape[3]), f32)
        for kxi in range(3):
            m = m + jnp.kron(jnp.eye(W, k=-(kxi - 1), dtype=f32), wf3[kyi, kxi])
        mb.append(m)
    mb = jnp.stack(mb)                                      # (3, W*Ci, W*Co)

    # vertical shift matrices: (Sh_d @ x)[h] = x[h+d] (zero outside range)
    sh = jnp.stack([jnp.eye(H, k=-1, dtype=f32), jnp.eye(H, k=1, dtype=f32),
                    jnp.eye(H, k=-2, dtype=f32), jnp.eye(H, k=2, dtype=f32)])

    # vertical depthwise weights, tiled over W (interleaved layout index = w*C + c)
    vw = jnp.stack([jnp.tile(L['w0v'][k], W) for k in range(3)]
                   + [jnp.tile(L['wsv'][k], W) for k in range(3)])

    b64 = jnp.concatenate([tile_bias(a['shift']), tile_bias(b3['shift'])], axis=0)
    b256 = jnp.concatenate([tile_bias(c['shift']), tile_bias(s['shift']),
                            tile_bias(L['b0h']), tile_bias(L['b0v']),
                            tile_bias(L['bsh']), tile_bias(L['bsv']),
                            tile_bias(L['b1'])], axis=0)

    return dict(wa=wa, mb=mb, sh=sh, wc=wc, ws=ws,
                m0h=dw_h_mat(L['w0h'], 1), msh=dw_h_mat(L['wsh'], 2),
                m1=kron_block(L['w1']), vw=vw, b64=b64, b256=b256)


# ---------------------------------------------------------------------------
# Deterministic synthetic parameters (inference-mode BN folded to scale/shift)
# ---------------------------------------------------------------------------
def make_params():
    keys = iter(jax.random.split(jax.random.PRNGKey(0), 64))

    def nrm(shape, s=0.1):
        return s * jax.random.normal(next(keys), shape, jnp.float32)

    def convnorm(cin, cout, k):
        w = nrm((cin, cout)) if k == 1 else nrm((k, k, cin, cout))
        b = nrm((cout,))
        gamma = 1.0 + nrm((cout,))
        beta = nrm((cout,))
        mean = nrm((cout,))
        var = 1.0 + 0.1 * jnp.abs(jax.random.normal(next(keys), (cout,), jnp.float32))
        scale = gamma / jnp.sqrt(var + 1e-5)
        shift = beta + scale * (b - mean)
        return dict(w=w, scale=scale, shift=shift)

    ch_in, ch_out, expansion = 4, 4, 4
    width, c_exp = ch_out, ch_out * expansion

    P = {
        'b2a': convnorm(ch_in, width, 1),
        'b2b': convnorm(width, width, 3),
        'b2c': convnorm(width, c_exp, 1),
        'short': convnorm(ch_in, c_exp, 1),
    }
    C = c_exp
    lska = {}
    for name in ('w0h', 'w0v', 'wsh', 'wsv'):
        lska[name] = 0.3 * jax.random.normal(next(keys), (3, C), jnp.float32)
    for name in ('b0h', 'b0v', 'bsh', 'bsv'):
        lska[name] = 0.05 * jax.random.normal(next(keys), (C,), jnp.float32)
    lska['w1'] = 0.2 * jax.random.normal(next(keys), (C, C), jnp.float32)
    lska['b1'] = 0.05 * jax.random.normal(next(keys), (C,), jnp.float32)
    P['lska'] = lska
    return P


# ---------------------------------------------------------------------------
# Pure-JAX reference (for correctness check)
# ---------------------------------------------------------------------------
def ref_forward(x_nchw, P):
    x = jnp.transpose(x_nchw, (0, 2, 3, 1))

    def pw(v, p, relu):
        y = jnp.einsum('bhwc,cd->bhwd', v, p['w']) * p['scale'] + p['shift']
        return jnp.maximum(y, 0.0) if relu else y

    def conv3(v, p):
        y = lax.conv_general_dilated(v, p['w'], (1, 1), [(1, 1), (1, 1)],
                                     dimension_numbers=('NHWC', 'HWIO', 'NHWC'))
        y = y * p['scale'] + p['shift']
        return jnp.maximum(y, 0.0)

    def dwconv(v, w, b, kh, kw, pad, dil):
        C = v.shape[-1]
        y = lax.conv_general_dilated(v, w.reshape(kh, kw, 1, C), (1, 1), pad,
                                     rhs_dilation=dil,
                                     dimension_numbers=('NHWC', 'HWIO', 'NHWC'),
                                     feature_group_count=C)
        return y + b

    out = pw(x, P['b2a'], True)
    out = conv3(out, P['b2b'])
    out = pw(out, P['b2c'], False)

    L = P['lska']
    a = dwconv(out, L['w0h'], L['b0h'], 1, 3, [(0, 0), (1, 1)], (1, 1))
    a = dwconv(a, L['w0v'], L['b0v'], 3, 1, [(1, 1), (0, 0)], (1, 1))
    a = dwconv(a, L['wsh'], L['bsh'], 1, 3, [(0, 0), (2, 2)], (1, 2))
    a = dwconv(a, L['wsv'], L['bsv'], 3, 1, [(2, 2), (0, 0)], (2, 1))
    a = jnp.einsum('bhwc,cd->bhwd', a, L['w1']) + L['b1']
    out = out * a

    short = pw(x, P['short'], False)
    y = jnp.maximum(out + short, 0.0)
    return jnp.transpose(y, (0, 3, 1, 2))


if __name__ == "__main__":
    P = make_params()
    x = jax.random.normal(jax.random.PRNGKey(0), (2, 4, 16, 16), jnp.float32)  # NCHW

    K = pack_params(P, H=16, W=16)
    out = jax.block_until_ready(bottleneck_lska_forward(x, K))

    ref = jax.block_until_ready(ref_forward(x, P))
    assert out.shape == ref.shape == (2, 16, 16, 16), out.shape
    err = float(jnp.max(jnp.abs(out - ref)))
    assert err < 2e-3, err

    print("KERNEL_OK")
</pallas_src>

<mosaic_0001>
module attributes {stable_mosaic.version = 11 : i64} {
  func.func @_fused_kernel(%arg0: i32, %arg1: memref<1x16x64xf32, #tpu.memory_space<vmem>>, %arg2: memref<64x64xf32, #tpu.memory_space<vmem>>, %arg3: memref<3x64x64xf32, #tpu.memory_space<vmem>>, %arg4: memref<4x16x16xf32, #tpu.memory_space<vmem>>, %arg5: memref<64x256xf32, #tpu.memory_space<vmem>>, %arg6: memref<64x256xf32, #tpu.memory_space<vmem>>, %arg7: memref<256x256xf32, #tpu.memory_space<vmem>>, %arg8: memref<256x256xf32, #tpu.memory_space<vmem>>, %arg9: memref<256x256xf32, #tpu.memory_space<vmem>>, %arg10: memref<6x256xf32, #tpu.memory_space<vmem>>, %arg11: memref<2x64xf32, #tpu.memory_space<vmem>>, %arg12: memref<7x256xf32, #tpu.memory_space<vmem>>, %arg13: memref<1x16x256xf32, #tpu.memory_space<vmem>>) attributes {dimension_semantics = [#tpu.dimension_semantics<parallel>], iteration_bounds = array<i64: 2>, scalar_prefetch = 0 : i64, scratch_operands = 0 : i64, tpu.core_type = #tpu.core_type<tc>, window_params = [{transform_indices = @transform_0, window_bounds = array<i64: 1, 16, 64>}, {pipeline_mode = #tpu.pipeline_mode<synchronous>, transform_indices = @transform_1, window_bounds = array<i64: 64, 64>}, {pipeline_mode = #tpu.pipeline_mode<synchronous>, transform_indices = @transform_2, window_bounds = array<i64: 3, 64, 64>}, {pipeline_mode = #tpu.pipeline_mode<synchronous>, transform_indices = @transform_3, window_bounds = array<i64: 4, 16, 16>}, {pipeline_mode = #tpu.pipeline_mode<synchronous>, transform_indices = @transform_4, window_bounds = array<i64: 64, 256>}, {pipeline_mode = #tpu.pipeline_mode<synchronous>, transform_indices = @transform_5, window_bounds = array<i64: 64, 256>}, {pipeline_mode = #tpu.pipeline_mode<synchronous>, transform_indices = @transform_6, window_bounds = array<i64: 256, 256>}, {pipeline_mode = #tpu.pipeline_mode<synchronous>, transform_indices = @transform_7, window_bounds = array<i64: 256, 256>}, {pipeline_mode = #tpu.pipeline_mode<synchronous>, transform_indices = @transform_8, window_bounds = array<i64: 256, 256>}, {pipeline_mode = #tpu.pipeline_mode<synchronous>, transform_indices = @transform_9, window_bounds = array<i64: 6, 256>}, {pipeline_mode = #tpu.pipeline_mode<synchronous>, transform_indices = @transform_10, window_bounds = array<i64: 2, 64>}, {pipeline_mode = #tpu.pipeline_mode<synchronous>, transform_indices = @transform_11, window_bounds = array<i64: 7, 256>}, {transform_indices = @transform_12, window_bounds = array<i64: 1, 16, 256>}]} {
    %c0 = arith.constant 0 : index
    %c0_0 = arith.constant 0 : index
    %c0_1 = arith.constant 0 : index
    %0 = vector.load %arg1[%c0, %c0_0, %c0_1] : memref<1x16x64xf32, #tpu.memory_space<vmem>>, vector<1x16x64xf32>
    %1 = vector.shape_cast %0 : vector<1x16x64xf32> to vector<16x64xf32>
    %c0_2 = arith.constant 0 : index
    %c0_3 = arith.constant 0 : index
    %c0_4 = arith.constant 0 : index
    %2 = vector.load %arg4[%c0_2, %c0_3, %c0_4] : memref<4x16x16xf32, #tpu.memory_space<vmem>>, vector<1x16x16xf32>
    %3 = vector.shape_cast %2 : vector<1x16x16xf32> to vector<16x16xf32>
    %c1 = arith.constant 1 : index
    %c0_5 = arith.constant 0 : index
    %c0_6 = arith.constant 0 : index
    %4 = vector.load %arg4[%c1, %c0_5, %c0_6] : memref<4x16x16xf32, #tpu.memory_space<vmem>>, vector<1x16x16xf32>
    %5 = vector.shape_cast %4 : vector<1x16x16xf32> to vector<16x16xf32>
    %c2 = arith.constant 2 : index
    %c0_7 = arith.constant 0 : index
    %c0_8 = arith.constant 0 : index
    %6 = vector.load %arg4[%c2, %c0_7, %c0_8] : memref<4x16x16xf32, #tpu.memory_space<vmem>>, vector<1x16x16xf32>
    %7 = vector.shape_cast %6 : vector<1x16x16xf32> to vector<16x16xf32>
    %c3 = arith.constant 3 : index
    %c0_9 = arith.constant 0 : index
    %c0_10 = arith.constant 0 : index
    %8 = vector.load %arg4[%c3, %c0_9, %c0_10] : memref<4x16x16xf32, #tpu.memory_space<vmem>>, vector<1x16x16xf32>
    %9 = vector.shape_cast %8 : vector<1x16x16xf32> to vector<16x16xf32>
    %c0_11 = arith.constant 0 : index
    %c0_12 = arith.constant 0 : index
    %10 = vector.load %arg10[%c0_11, %c0_12] : memref<6x256xf32, #tpu.memory_space<vmem>>, vector<6x256xf32>
    %c0_13 = arith.constant 0 : index
    %c0_14 = arith.constant 0 : index
    %11 = vector.load %arg11[%c0_13, %c0_14] : memref<2x64xf32, #tpu.memory_space<vmem>>, vector<2x64xf32>
    %c0_15 = arith.constant 0 : index
    %c0_16 = arith.constant 0 : index
    %12 = vector.load %arg12[%c0_15, %c0_16] : memref<7x256xf32, #tpu.memory_space<vmem>>, vector<7x256xf32>
    %c0_17 = arith.constant 0 : index
    %c0_18 = arith.constant 0 : index
    %13 = vector.load %arg2[%c0_17, %c0_18] : memref<64x64xf32, #tpu.memory_space<vmem>>, vector<64x64xf32>
    %cst = arith.constant dense<0.000000e+00> : vector<16x64xf32>
    %14 = tpu.matmul %1, %13, %cst {dimension_numbers = #tpu.dot_dimension_numbers<[1], [0], [0], [1], [0, 0, 1, 1], [], []>} : vector<16x64xf32>, vector<64x64xf32>, vector<16x64xf32> -> vector<16x64xf32>
    %15 = vector.extract_strided_slice %11 {offsets = [0, 0], sizes = [1, 64], strides = [1, 1]} : vector<2x64xf32> to vector<1x64xf32>
    %16 = vector.broadcast %15 : vector<1x64xf32> to vector<16x64xf32>
    %17 = arith.addf %14, %16 : vector<16x64xf32>
    %cst_19 = arith.constant 0.000000e+00 : f32
    %18 = vector.broadcast %cst_19 : f32 to vector<16x64xf32>
    %19 = arith.maximumf %17, %18 : vector<16x64xf32>
    %c1_20 = arith.constant 1 : index
    %c0_21 = arith.constant 0 : index
    %c0_22 = arith.constant 0 : index
    %20 = vector.load %arg3[%c1_20, %c0_21, %c0_22] : memref<3x64x64xf32, #tpu.memory_space<vmem>>, vector<1x64x64xf32>
    %21 = vector.shape_cast %20 : vector<1x64x64xf32> to vector<64x64xf32>
    %cst_23 = arith.constant dense<0.000000e+00> : vector<16x64xf32>
    %22 = tpu.matmul %19, %21, %cst_23 {dimension_numbers = #tpu.dot_dimension_numbers<[1], [0], [0], [1], [0, 0, 1, 1], [], []>} : vector<16x64xf32>, vector<64x64xf32>, vector<16x64xf32> -> vector<16x64xf32>
    %cst_24 = arith.constant dense<0.000000e+00> : vector<16x64xf32>
    %23 = tpu.matmul %3, %19, %cst_24 {dimension_numbers = #tpu.dot_dimension_numbers<[1], [0], [0], [1], [0, 0, 1, 1], [], []>} : vector<16x16xf32>, vector<16x64xf32>, vector<16x64xf32> -> vector<16x64xf32>
    %c0_25 = arith.constant 0 : index
    %c0_26 = arith.constant 0 : index
    %c0_27 = arith.constant 0 : index
    %24 = vector.load %arg3[%c0_25, %c0_26, %c0_27] : memref<3x64x64xf32, #tpu.memory_space<vmem>>, vector<1x64x64xf32>
    %25 = vector.shape_cast %24 : vector<1x64x64xf32> to vector<64x64xf32>
    %cst_28 = arith.constant dense<0.000000e+00> : vector<16x64xf32>
    %26 = tpu.matmul %23, %25, %cst_28 {dimension_numbers = #tpu.dot_dimension_numbers<[1], [0], [0], [1], [0, 0, 1, 1], [], []>} : vector<16x64xf32>, vector<64x64xf32>, vector<16x64xf32> -> vector<16x64xf32>
    %27 = arith.addf %22, %26 : vector<16x64xf32>
    %cst_29 = arith.constant dense<0.000000e+00> : vector<16x64xf32>
    %28 = tpu.matmul %5, %19, %cst_29 {dimension_numbers = #tpu.dot_dimension_numbers<[1], [0], [0], [1], [0, 0, 1, 1], [], []>} : vector<16x16xf32>, vector<16x64xf32>, vector<16x64xf32> -> vector<16x64xf32>
    %c2_30 = arith.constant 2 : index
    %c0_31 = arith.constant 0 : index
    %c0_32 = arith.constant 0 : index
    %29 = vector.load %arg3[%c2_30, %c0_31, %c0_32] : memref<3x64x64xf32, #tpu.memory_space<vmem>>, vector<1x64x64xf32>
    %30 = vector.shape_cast %29 : vector<1x64x64xf32> to vector<64x64xf32>
    %cst_33 = arith.constant dense<0.000000e+00> : vector<16x64xf32>
    %31 = tpu.matmul %28, %30, %cst_33 {dimension_numbers = #tpu.dot_dimension_numbers<[1], [0], [0], [1], [0, 0, 1, 1], [], []>} : vector<16x64xf32>, vector<64x64xf32>, vector<16x64xf32> -> vector<16x64xf32>
    %32 = arith.addf %27, %31 : vector<16x64xf32>
    %33 = vector.extract_strided_slice %11 {offsets = [1, 0], sizes = [1, 64], strides = [1, 1]} : vector<2x64xf32> to vector<1x64xf32>
    %34 = vector.broadcast %33 : vector<1x64xf32> to vector<16x64xf32>
    %35 = arith.addf %32, %34 : vector<16x64xf32>
    %cst_34 = arith.constant 0.000000e+00 : f32
    %36 = vector.broadcast %cst_34 : f32 to vector<16x64xf32>
    %37 = arith.maximumf %35, %36 : vector<16x64xf32>
    %c0_35 = arith.constant 0 : index
    %c0_36 = arith.constant 0 : index
    %38 = vector.load %arg5[%c0_35, %c0_36] : memref<64x256xf32, #tpu.memory_space<vmem>>, vector<64x256xf32>
    %cst_37 = arith.constant dense<0.000000e+00> : vector<16x256xf32>
    %39 = tpu.matmul %37, %38, %cst_37 {dimension_numbers = #tpu.dot_dimension_numbers<[1], [0], [0], [1], [0, 0, 1, 1], [], []>} : vector<16x64xf32>, vector<64x256xf32>, vector<16x256xf32> -> vector<16x256xf32>
    %40 = vector.extract_strided_slice %12 {offsets = [0, 0], sizes = [1, 256], strides = [1, 1]} : vector<7x256xf32> to vector<1x256xf32>
    %41 = vector.broadcast %40 : vector<1x256xf32> to vector<16x256xf32>
    %42 = arith.addf %39, %41 : vector<16x256xf32>
    %c0_38 = arith.constant 0 : index
    %c0_39 = arith.constant 0 : index
    %43 = vector.load %arg6[%c0_38, %c0_39] : memref<64x256xf32, #tpu.memory_space<vmem>>, vector<64x256xf32>
    %cst_40 = arith.constant dense<0.000000e+00> : vector<16x256xf32>
    %44 = tpu.matmul %1, %43, %cst_40 {dimension_numbers = #tpu.dot_dimension_numbers<[1], [0], [0], [1], [0, 0, 1, 1], [], []>} : vector<16x64xf32>, vector<64x256xf32>, vector<16x256xf32> -> vector<16x256xf32>
    %45 = vector.extract_strided_slice %12 {offsets = [1, 0], sizes = [1, 256], strides = [1, 1]} : vector<7x256xf32> to vector<1x256xf32>
    %46 = vector.broadcast %45 : vector<1x256xf32> to vector<16x256xf32>
    %47 = arith.addf %44, %46 : vector<16x256xf32>
    %c0_41 = arith.constant 0 : index
    %c0_42 = arith.constant 0 : index
    %48 = vector.load %arg7[%c0_41, %c0_42] : memref<256x256xf32, #tpu.memory_space<vmem>>, vector<256x256xf32>
    %cst_43 = arith.constant dense<0.000000e+00> : vector<16x256xf32>
    %49 = tpu.matmul %42, %48, %cst_43 {dimension_numbers = #tpu.dot_dimension_numbers<[1], [0], [0], [1], [0, 0, 1, 1], [], []>} : vector<16x256xf32>, vector<256x256xf32>, vector<16x256xf32> -> vector<16x256xf32>
    %50 = vector.extract_strided_slice %12 {offsets = [2, 0], sizes = [1, 256], strides = [1, 1]} : vector<7x256xf32> to vector<1x256xf32>
    %51 = vector.broadcast %50 : vector<1x256xf32> to vector<16x256xf32>
    %52 = arith.addf %49, %51 : vector<16x256xf32>
    %cst_44 = arith.constant dense<0.000000e+00> : vector<16x256xf32>
    %53 = tpu.matmul %3, %52, %cst_44 {dimension_numbers = #tpu.dot_dimension_numbers<[1], [0], [0], [1], [0, 0, 1, 1], [], []>} : vector<16x16xf32>, vector<16x256xf32>, vector<16x256xf32> -> vector<16x256xf32>
    %54 = vector.extract_strided_slice %10 {offsets = [0, 0], sizes = [1, 256], strides = [1, 1]} : vector<6x256xf32> to vector<1x256xf32>
    %55 = vector.broadcast %54 : vector<1x256xf32> to vector<16x256xf32>
    %56 = arith.mulf %53, %55 : vector<16x256xf32>
    %57 = vector.extract_strided_slice %10 {offsets = [1, 0], sizes = [1, 256], strides = [1, 1]} : vector<6x256xf32> to vector<1x256xf32>
    %58 = vector.broadcast %57 : vector<1x256xf32> to vector<16x256xf32>
    %59 = arith.mulf %52, %58 : vector<16x256xf32>
    %60 = arith.addf %56, %59 : vector<16x256xf32>
    %cst_45 = arith.constant dense<0.000000e+00> : vector<16x256xf32>
    %61 = tpu.matmul %5, %52, %cst_45 {dimension_numbers = #tpu.dot_dimension_numbers<[1], [0], [0], [1], [0, 0, 1, 1], [], []>} : vector<16x16xf32>, vector<16x256xf32>, vector<16x256xf32> -> vector<16x256xf32>
    %62 = vector.extract_strided_slice %10 {offsets = [2, 0], sizes = [1, 256], strides = [1, 1]} : vector<6x256xf32> to vector<1x256xf32>
    %63 = vector.broadcast %62 : vector<1x256xf32> to vector<16x256xf32>
    %64 = arith.mulf %61, %63 : vector<16x256xf32>
    %65 = arith.addf %60, %64 : vector<16x256xf32>
    %66 = vector.extract_strided_slice %12 {offsets = [3, 0], sizes = [1, 256], strides = [1, 1]} : vector<7x256xf32> to vector<1x256xf32>
    %67 = vector.broadcast %66 : vector<1x256xf32> to vector<16x256xf32>
    %68 = arith.addf %65, %67 : vector<16x256xf32>
    %c0_46 = arith.constant 0 : index
    %c0_47 = arith.constant 0 : index
    %69 = vector.load %arg8[%c0_46, %c0_47] : memref<256x256xf32, #tpu.memory_space<vmem>>, vector<256x256xf32>
    %cst_48 = arith.constant dense<0.000000e+00> : vector<16x256xf32>
    %70 = tpu.matmul %68, %69, %cst_48 {dimension_numbers = #tpu.dot_dimension_numbers<[1], [0], [0], [1], [0, 0, 1, 1], [], []>} : vector<16x256xf32>, vector<256x256xf32>, vector<16x256xf32> -> vector<16x256xf32>
    %71 = vector.extract_strided_slice %12 {offsets = [4, 0], sizes = [1, 256], strides = [1, 1]} : vector<7x256xf32> to vector<1x256xf32>
    %72 = vector.broadcast %71 : vector<1x256xf32> to vector<16x256xf32>
    %73 = arith.addf %70, %72 : vector<16x256xf32>
    %cst_49 = arith.constant dense<0.000000e+00> : vector<16x256xf32>
    %74 = tpu.matmul %7, %73, %cst_49 {dimension_numbers = #tpu.dot_dimension_numbers<[1], [0], [0], [1], [0, 0, 1, 1], [], []>} : vector<16x16xf32>, vector<16x256xf32>, vector<16x256xf32> -> vector<16x256xf32>
    %75 = vector.extract_strided_slice %10 {offsets = [3, 0], sizes = [1, 256], strides = [1, 1]} : vector<6x256xf32> to vector<1x256xf32>
    %76 = vector.broadcast %75 : vector<1x256xf32> to vector<16x256xf32>
    %77 = arith.mulf %74, %76 : vector<16x256xf32>
    %78 = vector.extract_strided_slice %10 {offsets = [4, 0], sizes = [1, 256], strides = [1, 1]} : vector<6x256xf32> to vector<1x256xf32>
    %79 = vector.broadcast %78 : vector<1x256xf32> to vector<16x256xf32>
    %80 = arith.mulf %73, %79 : vector<16x256xf32>
    %81 = arith.addf %77, %80 : vector<16x256xf32>
    %cst_50 = arith.constant dense<0.000000e+00> : vector<16x256xf32>
    %82 = tpu.matmul %9, %73, %cst_50 {dimension_numbers = #tpu.dot_dimension_numbers<[1], [0], [0], [1], [0, 0, 1, 1], [], []>} : vector<16x16xf32>, vector<16x256xf32>, vector<16x256xf32> -> vector<16x256xf32>
    %83 = vector.extract_strided_slice %10 {offsets = [5, 0], sizes = [1, 256], strides = [1, 1]} : vector<6x256xf32> to vector<1x256xf32>
    %84 = vector.broadcast %83 : vector<1x256xf32> to vector<16x256xf32>
    %85 = arith.mulf %82, %84 : vector<16x256xf32>
    %86 = arith.addf %81, %85 : vector<16x256xf32>
    %87 = vector.extract_strided_slice %12 {offsets = [5, 0], sizes = [1, 256], strides = [1, 1]} : vector<7x256xf32> to vector<1x256xf32>
    %88 = vector.broadcast %87 : vector<1x256xf32> to vector<16x256xf32>
    %89 = arith.addf %86, %88 : vector<16x256xf32>
    %c0_51 = arith.constant 0 : index
    %c0_52 = arith.constant 0 : index
    %90 = vector.load %arg9[%c0_51, %c0_52] : memref<256x256xf32, #tpu.memory_space<vmem>>, vector<256x256xf32>
    %cst_53 = arith.constant dense<0.000000e+00> : vector<16x256xf32>
    %91 = tpu.matmul %89, %90, %cst_53 {dimension_numbers = #tpu.dot_dimension_numbers<[1], [0], [0], [1], [0, 0, 1, 1], [], []>} : vector<16x256xf32>, vector<256x256xf32>, vector<16x256xf32> -> vector<16x256xf32>
    %92 = vector.extract_strided_slice %12 {offsets = [6, 0], sizes = [1, 256], strides = [1, 1]} : vector<7x256xf32> to vector<1x256xf32>
    %93 = vector.broadcast %92 : vector<1x256xf32> to vector<16x256xf32>
    %94 = arith.addf %91, %93 : vector<16x256xf32>
    %95 = arith.mulf %42, %94 : vector<16x256xf32>
    %96 = arith.addf %95, %47 : vector<16x256xf32>
    %cst_54 = arith.constant 0.000000e+00 : f32
    %97 = vector.broadcast %cst_54 : f32 to vector<16x256xf32>
    %98 = arith.maximumf %96, %97 : vector<16x256xf32>
    %c0_55 = arith.constant 0 : index
    %c0_56 = arith.constant 0 : index
    %c0_57 = arith.constant 0 : index
    %99 = vector.load %arg13[%c0_55, %c0_56, %c0_57] : memref<1x16x256xf32, #tpu.memory_space<vmem>>, vector<1x16x256xf32>
    %100 = vector.shape_cast %99 : vector<1x16x256xf32> to vector<16x256xf32>
    %101 = vector.shape_cast %98 : vector<16x256xf32> to vector<1x16x256xf32>
    tpu.vector_store %arg13[%c0_55, %c0_56, %c0_57], %101 {strides = array<i32>} : memref<1x16x256xf32, #tpu.memory_space<vmem>>, vector<1x16x256xf32>,
    return
  }
  func.func @transform_0(%arg0: i32) -> (i32, i32, i32) {
    %c0_i32 = arith.constant 0 : i32
    %c0_i32_0 = arith.constant 0 : i32
    %c0_i32_1 = arith.constant 0 : i32
    return %arg0, %c0_i32, %c0_i32_0 : i32, i32, i32
  }
  func.func @transform_1(%arg0: i32) -> (i32, i32) {
    %c0_i32 = arith.constant 0 : i32
    %c0_i32_0 = arith.constant 0 : i32
    %c0_i32_1 = arith.constant 0 : i32
    return %c0_i32, %c0_i32_0 : i32, i32
  }
  func.func @transform_2(%arg0: i32) -> (i32, i32, i32) {
    %c0_i32 = arith.constant 0 : i32
    %c0_i32_0 = arith.constant 0 : i32
    %c0_i32_1 = arith.constant 0 : i32
    %c0_i32_2 = arith.constant 0 : i32
    return %c0_i32, %c0_i32_0, %c0_i32_1 : i32, i32, i32
  }
  func.func @transform_3(%arg0: i32) -> (i32, i32, i32) {
    %c0_i32 = arith.constant 0 : i32
    %c0_i32_0 = arith.constant 0 : i32
    %c0_i32_1 = arith.constant 0 : i32
    %c0_i32_2 = arith.constant 0 : i32
    return %c0_i32, %c0_i32_0, %c0_i32_1 : i32, i32, i32
  }
  func.func @transform_4(%arg0: i32) -> (i32, i32) {
    %c0_i32 = arith.constant 0 : i32
    %c0_i32_0 = arith.constant 0 : i32
    %c0_i32_1 = arith.constant 0 : i32
    return %c0_i32, %c0_i32_0 : i32, i32
  }
  func.func @transform_5(%arg0: i32) -> (i32, i32) {
    %c0_i32 = arith.constant 0 : i32
    %c0_i32_0 = arith.constant 0 : i32
    %c0_i32_1 = arith.constant 0 : i32
    return %c0_i32, %c0_i32_0 : i32, i32
  }
  func.func @transform_6(%arg0: i32) -> (i32, i32) {
    %c0_i32 = arith.constant 0 : i32
    %c0_i32_0 = arith.constant 0 : i32
    %c0_i32_1 = arith.constant 0 : i32
    return %c0_i32, %c0_i32_0 : i32, i32
  }
  func.func @transform_7(%arg0: i32) -> (i32, i32) {
    %c0_i32 = arith.constant 0 : i32
    %c0_i32_0 = arith.constant 0 : i32
    %c0_i32_1 = arith.constant 0 : i32
    return %c0_i32, %c0_i32_0 : i32, i32
  }
  func.func @transform_8(%arg0: i32) -> (i32, i32) {
    %c0_i32 = arith.constant 0 : i32
    %c0_i32_0 = arith.constant 0 : i32
    %c0_i32_1 = arith.constant 0 : i32
    return %c0_i32, %c0_i32_0 : i32, i32
  }
  func.func @transform_9(%arg0: i32) -> (i32, i32) {
    %c0_i32 = arith.constant 0 : i32
    %c0_i32_0 = arith.constant 0 : i32
    %c0_i32_1 = arith.constant 0 : i32
    return %c0_i32, %c0_i32_0 : i32, i32
  }
  func.func @transform_10(%arg0: i32) -> (i32, i32) {
    %c0_i32 = arith.constant 0 : i32
    %c0_i32_0 = arith.constant 0 : i32
    %c0_i32_1 = arith.constant 0 : i32
    return %c0_i32, %c0_i32_0 : i32, i32
  }
  func.func @transform_11(%arg0: i32) -> (i32, i32) {
    %c0_i32 = arith.constant 0 : i32
    %c0_i32_0 = arith.constant 0 : i32
    %c0_i32_1 = arith.constant 0 : i32
    return %c0_i32, %c0_i32_0 : i32, i32
  }
  func.func @transform_12(%arg0: i32) -> (i32, i32, i32) {
    %c0_i32 = arith.constant 0 : i32
    %c0_i32_0 = arith.constant 0 : i32
    %c0_i32_1 = arith.constant 0 : i32
    return %arg0, %c0_i32, %c0_i32_0 : i32, i32, i32
  }
}

</mosaic_0001>

<llo_original>
// kernel: bottleneck_lska_forward.1
$region0: #{bottleneck_lska_forward.1}
  #allocation0 [shape = 'u32[]', space=smem, size = 0x4, offset = 0x4, fixed_abs, tag = 'smem constant byte address 0x4 - core index']
  #allocation1 [shape = 'u32[144,128]{1,0:T(1,128)}', space=vmem, size = 0x12000, scoped, tag = 'internal scratch']
  %s0 = inlined_call_operand.vmem [shape: f32[2,16,64], index: 0, kind: input, shape index: {}]
  %s1 = inlined_call_operand.hbm [shape: f32[64,64], index: 1, kind: input, shape index: {}]
  %s2 = inlined_call_operand.vmem [shape: f32[3,64,64], index: 2, kind: input, shape index: {}]
  %s3 = inlined_call_operand.hbm [shape: f32[4,16,16], index: 3, kind: input, shape index: {}]
  %s4 = inlined_call_operand.vmem [shape: f32[64,256], index: 4, kind: input, shape index: {}]
  %s5 = inlined_call_operand.vmem [shape: f32[64,256], index: 5, kind: input, shape index: {}]
  %s6 = inlined_call_operand.hbm [shape: f32[256,256], index: 6, kind: input, shape index: {}]
  %s7 = inlined_call_operand.hbm [shape: f32[256,256], index: 7, kind: input, shape index: {}]
  %s8 = inlined_call_operand.hbm [shape: f32[256,256], index: 8, kind: input, shape index: {}]
  %s9 = inlined_call_operand.hbm [shape: f32[6,256], index: 9, kind: input, shape index: {}]
  %s10 = inlined_call_operand.vmem [shape: f32[2,64], index: 10, kind: input, shape index: {}]
  %s11 = inlined_call_operand.hbm [shape: f32[7,256], index: 11, kind: input, shape index: {}]
  %s12 = inlined_call_operand.vmem [shape: f32[2,16,256], index: 12, kind: output, shape index: {}]
  %s13 = sld [smem:[#allocation0]]
  $region109: #{bottleneck_lska_forward.1} parent=0
    _
  %s15 = ssub.s32 1, %s13
  %s16 = scalar_select 0, %s15, %s13
  $region1: #{bottleneck_lska_forward.1} parent=0
    #allocation2 [shape = 'u8[32768]{0}', space=vmem, size = 0x8000, scoped, tag = 'input window, operand 1, single buffered']
    #allocation3 [shape = 's32[2]{0}', space=sflag, size = 0x8, scoped, tag = 'scoped memory for bottleneck_lska_forward.1']
    #allocation4 [shape = 'u8[32768]{0}', space=vmem, size = 0x8000, scoped, tag = 'input window, operand 3, single buffered']
    #allocation5 [shape = 's32[1]{0}', space=sflag, size = 0x4, scoped, tag = 'scoped memory for bottleneck_lska_forward.1']
    #allocation6 [shape = 'u8[262144]{0}', space=vmem, size = 0x40000, scoped, tag = 'input window, operand 6, single buffered']
    #allocation7 [shape = 'u8[262144]{0}', space=vmem, size = 0x40000, scoped, tag = 'input window, operand 7, single buffered']
    #allocation8 [shape = 's32[1]{0}', space=sflag, size = 0x4, scoped, tag = 'scoped memory for bottleneck_lska_forward.1']
    #allocation9 [shape = 'u8[262144]{0}', space=vmem, size = 0x40000, scoped, tag = 'input window, operand 8, single buffered']
    #allocation10 [shape = 'u8[8192]{0}', space=vmem, size = 0x2000, scoped, tag = 'input window, operand 9, single buffered']
    #allocation11 [shape = 's32[1]{0}', space=sflag, size = 0x4, scoped, tag = 'scoped memory for bottleneck_lska_forward.1']
    #allocation12 [shape = 'u8[8192]{0}', space=vmem, size = 0x2000, scoped, tag = 'input window, operand 11, single buffered']
    %17 = vsyncpa [#allocation3], 0
    %18 = vsyncpa [#allocation5], 0
    %19 = vsyncpa [#allocation8], 0
    %20 = vsyncpa [#allocation11], 0
    loop: start=0, step=1, limit=4
    $region2: #{bottleneck_lska_forward.1} parent=1 // loop_pre_header
      _
    $region3: #{bottleneck_lska_forward.1} parent=1 // loop_header
      %s22 = sphi 0, %s26
      %p23 = scmp.ge.s32.totalorder %s22, 4
      %s32 = sphi 0, %s34
      %s35 = sphi 0, %s32
      %s36 = sphi 0, %s35
      %s52 = sphi 0, %s36
      %s56 = sphi 0, %s56
      %s58 = sphi 0, %s56
      %s59 = sphi 0, %s58
      %s73 = sphi 0, %s59
      %s77 = sphi 0, %s77
      %s79 = sphi 0, %s77
      %s80 = sphi 0, %s79
      %s94 = sphi 0, %s80
      %s98 = sphi 0, %s98
      %s100 = sphi 0, %s98
      %s101 = sphi 0, %s100
      %s115 = sphi 0, %s101
      %s119 = sphi 0, %s119
      %s121 = sphi 0, %s119
      %s122 = sphi 0, %s121
      %s136 = sphi 0, %s122
      %s140 = sphi 0, %s140
      %s142 = sphi 0, %s140
      %s143 = sphi 0, %s142
      %s157 = sphi 0, %s143
      %s161 = sphi 0, %s161
      %s163 = sphi 0, %s161
      %s164 = sphi 0, %s163
      %s178 = sphi 0, %s164
      %s182 = sphi 0, %s182
      %s184 = sphi 0, %s182
      %s185 = sphi 0, %s184
      %s199 = sphi 0, %s185
      %s203 = sphi 0, %s203
      %s205 = sphi 0, %s203
      %s206 = sphi 0, %s205
      %s220 = sphi 0, %s206
      %s224 = sphi 0, %s224
      %s226 = sphi 0, %s224
      %s227 = sphi 0, %s226
      %s241 = sphi 0, %s227
      %s245 = sphi 0, %s245
      %s247 = sphi 0, %s245
      %s248 = sphi 0, %s247
      %s262 = sphi 0, %s248
      %s266 = sphi 0, %s266
      %s268 = sphi 0, %s266
      %s269 = sphi 0, %s268
      %s283 = sphi 0, %s269
      %s289 = sphi 0, %s291
      %s292 = sphi 0, %s289
      %s293 = sphi 0, %s292
      %s309 = sphi 0, %s293
    $region4: #{bottleneck_lska_forward.1} parent=1 // loop_header_branch
      %25 = sbr.rel (%p23) target = $region8
    $region5: #{bottleneck_lska_forward.1} parent=1 // loop_body
      %s27 = ssub.s32 %s22, 1
      %s28 = ssub.s32 %s22, 2
      %s29 = sadd.s32 %s22, 1
      %s30 = ssub.s32 %s22, %s29
      %p31 = scmp.eq.s32.totalorder %s30, 0
      %s33 = sadd.s32 %s32, 1
      %s34 = scalar_select %p31, %s32, %s33
      %p37 = pneg %p31
      %p38 = scmp.eq.s32.totalorder %s22, 1
      %p39 = por %p37, %p38
      %p40 = scmp.ne.s32.totalorder %s32, %s35
      %p41 = scmp.eq.s32.totalorder %s22, 0
      %p42 = por %p40, %p41
      %p43 = scmp.ne.s32.totalorder %s32, %s35
      %p44 = scmp.eq.s32.totalorder %s27, 1
      %p45 = por %p43, %p44
      %p46 = scmp.ne.s32.totalorder %s35, %s36
      %p47 = scmp.eq.s32.totalorder %s27, 0
      %p48 = por %p46, %p47
      %p49 = scmp.ne.s32.totalorder %s35, %s36
      %p50 = scmp.eq.s32.totalorder %s28, 1
      %p51 = por %p49, %p50
      %p53 = scmp.ne.s32.totalorder %s36, %s52
      %p54 = scmp.eq.s32.totalorder %s28, 0
      %p55 = por %p53, %p54
      %s57 = sadd.s32 %s56, 1
      %p60 = scmp.eq.s32.totalorder %s22, 1
      %p61 = scmp.ne.s32.totalorder %s56, %s58
      %p62 = scmp.eq.s32.totalorder %s22, 0
      %p63 = por %p61, %p62
      %p64 = scmp.ne.s32.totalorder %s56, %s58
      %p65 = scmp.eq.s32.totalorder %s27, 1
      %p66 = por %p64, %p65
      %p67 = scmp.ne.s32.totalorder %s58, %s59
      %p68 = scmp.eq.s32.totalorder %s27, 0
      %p69 = por %p67, %p68
      %p70 = scmp.ne.s32.totalorder %s58, %s59
      %p71 = scmp.eq.s32.totalorder %s28, 1
      %p72 = por %p70, %p71
      %p74 = scmp.ne.s32.totalorder %s59, %s73
      %p75 = scmp.eq.s32.totalorder %s28, 0
      %p76 = por %p74, %p75
      %s78 = sadd.s32 %s77, 1
      %p81 = scmp.eq.s32.totalorder %s22, 1
      %p82 = scmp.ne.s32.totalorder %s77, %s79
      %p83 = scmp.eq.s32.totalorder %s22, 0
      %p84 = por %p82, %p83
      %p85 = scmp.ne.s32.totalorder %s77, %s79
      %p86 = scmp.eq.s32.totalorder %s27, 1
      %p87 = por %p85, %p86
      %p88 = scmp.ne.s32.totalorder %s79, %s80
      %p89 = scmp.eq.s32.totalorder %s27, 0
      %p90 = por %p88, %p89
      %p91 = scmp.ne.s32.totalorder %s79, %s80
      %p92 = scmp.eq.s32.totalorder %s28, 1
      %p93 = por %p91, %p92
      %p95 = scmp.ne.s32.totalorder %s80, %s94
      %p96 = scmp.eq.s32.totalorder %s28, 0
      %p97 = por %p95, %p96
      %s99 = sadd.s32 %s98, 1
      %p102 = scmp.eq.s32.totalorder %s22, 1
      %p103 = scmp.ne.s32.totalorder %s98, %s100
      %p104 = scmp.eq.s32.totalorder %s22, 0
      %p105 = por %p103, %p104
      %p106 = scmp.ne.s32.totalorder %s98, %s100
      %p107 = scmp.eq.s32.totalorder %s27, 1
      %p108 = por %p106, %p107
      %p109 = scmp.ne.s32.totalorder %s100, %s101
      %p110 = scmp.eq.s32.totalorder %s27, 0
      %p111 = por %p109, %p110
      %p112 = scmp.ne.s32.totalorder %s100, %s101
      %p113 = scmp.eq.s32.totalorder %s28, 1
      %p114 = por %p112, %p113
      %p116 = scmp.ne.s32.totalorder %s101, %s115
      %p117 = scmp.eq.s32.totalorder %s28, 0
      %p118 = por %p116, %p117
      %s120 = sadd.s32 %s119, 1
      %p123 = scmp.eq.s32.totalorder %s22, 1
      %p124 = scmp.ne.s32.totalorder %s119, %s121
      %p125 = scmp.eq.s32.totalorder %s22, 0
      %p126 = por %p124, %p125
      %p127 = scmp.ne.s32.totalorder %s119, %s121
      %p128 = scmp.eq.s32.totalorder %s27, 1
      %p129 = por %p127, %p128
      %p130 = scmp.ne.s32.totalorder %s121, %s122
      %p131 = scmp.eq.s32.totalorder %s27, 0
      %p132 = por %p130, %p131
      %p133 = scmp.ne.s32.totalorder %s121, %s122
      %p134 = scmp.eq.s32.totalorder %s28, 1
      %p135 = por %p133, %p134
      %p137 = scmp.ne.s32.totalorder %s122, %s136
      %p138 = scmp.eq.s32.totalorder %s28, 0
      %p139 = por %p137, %p138
      %s141 = sadd.s32 %s140, 1
      %p144 = scmp.eq.s32.totalorder %s22, 1
      %p145 = scmp.ne.s32.totalorder %s140, %s142
      %p146 = scmp.eq.s32.totalorder %s22, 0
      %p147 = por %p145, %p146
      %p148 = scmp.ne.s32.totalorder %s140, %s142
      %p149 = scmp.eq.s32.totalorder %s27, 1
      %p150 = por %p148, %p149
      %p151 = scmp.ne.s32.totalorder %s142, %s143
      %p152 = scmp.eq.s32.totalorder %s27, 0
      %p153 = por %p151, %p152
      %p154 = scmp.ne.s32.totalorder %s142, %s143
      %p155 = scmp.eq.s32.totalorder %s28, 1
      %p156 = por %p154, %p155
      %p158 = scmp.ne.s32.totalorder %s143, %s157
      %p159 = scmp.eq.s32.totalorder %s28, 0
      %p160 = por %p158, %p159
      %s162 = sadd.s32 %s161, 1
      %p165 = scmp.eq.s32.totalorder %s22, 1
      %p166 = scmp.ne.s32.totalorder %s161, %s163
      %p167 = scmp.eq.s32.totalorder %s22, 0
      %p168 = por %p166, %p167
      %p169 = scmp.ne.s32.totalorder %s161, %s163
      %p170 = scmp.eq.s32.totalorder %s27, 1
      %p171 = por %p169, %p170
      %p172 = scmp.ne.s32.totalorder %s163, %s164
      %p173 = scmp.eq.s32.totalorder %s27, 0
      %p174 = por %p172, %p173
      %p175 = scmp.ne.s32.totalorder %s163, %s164
      %p176 = scmp.eq.s32.totalorder %s28, 1
      %p177 = por %p175, %p176
      %p179 = scmp.ne.s32.totalorder %s164, %s178
      %p180 = scmp.eq.s32.totalorder %s28, 0
      %p181 = por %p179, %p180
      %s183 = sadd.s32 %s182, 1
      %p186 = scmp.eq.s32.totalorder %s22, 1
      %p187 = scmp.ne.s32.totalorder %s182, %s184
      %p188 = scmp.eq.s32.totalorder %s22, 0
      %p189 = por %p187, %p188
      %p190 = scmp.ne.s32.totalorder %s182, %s184
      %p191 = scmp.eq.s32.totalorder %s27, 1
      %p192 = por %p190, %p191
      %p193 = scmp.ne.s32.totalorder %s184, %s185
      %p194 = scmp.eq.s32.totalorder %s27, 0
      %p195 = por %p193, %p194
      %p196 = scmp.ne.s32.totalorder %s184, %s185
      %p197 = scmp.eq.s32.totalorder %s28, 1
      %p198 = por %p196, %p197
      %p200 = scmp.ne.s32.totalorder %s185, %s199
      %p201 = scmp.eq.s32.totalorder %s28, 0
      %p202 = por %p200, %p201
      %s204 = sadd.s32 %s203, 1
      %p207 = scmp.eq.s32.totalorder %s22, 1
      %p208 = scmp.ne.s32.totalorder %s203, %s205
      %p209 = scmp.eq.s32.totalorder %s22, 0
      %p210 = por %p208, %p209
      %p211 = scmp.ne.s32.totalorder %s203, %s205
      %p212 = scmp.eq.s32.totalorder %s27, 1
      %p213 = por %p211, %p212
      %p214 = scmp.ne.s32.totalorder %s205, %s206
      %p215 = scmp.eq.s32.totalorder %s27, 0
      %p216 = por %p214, %p215
      %p217 = scmp.ne.s32.totalorder %s205, %s206
      %p218 = scmp.eq.s32.totalorder %s28, 1
      %p219 = por %p217, %p218
      %p221 = scmp.ne.s32.totalorder %s206, %s220
      %p222 = scmp.eq.s32.totalorder %s28, 0
      %p223 = por %p221, %p222
      %s225 = sadd.s32 %s224, 1
      %p228 = scmp.eq.s32.totalorder %s22, 1
      %p229 = scmp.ne.s32.totalorder %s224, %s226
      %p230 = scmp.eq.s32.totalorder %s22, 0
      %p231 = por %p229, %p230
      %p232 = scmp.ne.s32.totalorder %s224, %s226
      %p233 = scmp.eq.s32.totalorder %s27, 1
      %p234 = por %p232, %p233
      %p235 = scmp.ne.s32.totalorder %s226, %s227
      %p236 = scmp.eq.s32.totalorder %s27, 0
      %p237 = por %p235, %p236
      %p238 = scmp.ne.s32.totalorder %s226, %s227
      %p239 = scmp.eq.s32.totalorder %s28, 1
      %p240 = por %p238, %p239
      %p242 = scmp.ne.s32.totalorder %s227, %s241
      %p243 = scmp.eq.s32.totalorder %s28, 0
      %p244 = por %p242, %p243
      %s246 = sadd.s32 %s245, 1
      %p249 = scmp.eq.s32.totalorder %s22, 1
      %p250 = scmp.ne.s32.totalorder %s245, %s247
      %p251 = scmp.eq.s32.totalorder %s22, 0
      %p252 = por %p250, %p251
      %p253 = scmp.ne.s32.totalorder %s245, %s247
      %p254 = scmp.eq.s32.totalorder %s27, 1
      %p255 = por %p253, %p254
      %p256 = scmp.ne.s32.totalorder %s247, %s248
      %p257 = scmp.eq.s32.totalorder %s27, 0
      %p258 = por %p256, %p257
      %p259 = scmp.ne.s32.totalorder %s247, %s248
      %p260 = scmp.eq.s32.totalorder %s28, 1
      %p261 = por %p259, %p260
      %p263 = scmp.ne.s32.totalorder %s248, %s262
      %p264 = scmp.eq.s32.totalorder %s28, 0
      %p265 = por %p263, %p264
      %s267 = sadd.s32 %s266, 1
      %p270 = scmp.eq.s32.totalorder %s22, 1
      %p271 = scmp.ne.s32.totalorder %s266, %s268
      %p272 = scmp.eq.s32.totalorder %s22, 0
      %p273 = por %p271, %p272
      %p274 = scmp.ne.s32.totalorder %s266, %s268
      %p275 = scmp.eq.s32.totalorder %s27, 1
      %p276 = por %p274, %p275
      %p277 = scmp.ne.s32.totalorder %s268, %s269
      %p278 = scmp.eq.s32.totalorder %s27, 0
      %p279 = por %p277, %p278
      %p280 = scmp.ne.s32.totalorder %s268, %s269
      %p281 = scmp.eq.s32.totalorder %s28, 1
      %p282 = por %p280, %p281
      %p284 = scmp.ne.s32.totalorder %s269, %s283
      %p285 = scmp.eq.s32.totalorder %s28, 0
      %p286 = por %p284, %p285
      %s287 = ssub.s32 %s22, %s29
      %p288 = scmp.eq.s32.totalorder %s287, 0
      %s290 = sadd.s32 %s289, 1
      %s291 = scalar_select %p288, %s289, %s290
      %p294 = pneg %p288
      %p295 = scmp.eq.s32.totalorder %s22, 1
      %p296 = por %p294, %p295
      %p297 = scmp.ne.s32.totalorder %s289, %s292
      %p298 = scmp.eq.s32.totalorder %s22, 0
      %p299 = por %p297, %p298
      %p300 = scmp.ne.s32.totalorder %s289, %s292
      %p301 = scmp.eq.s32.totalorder %s27, 1
      %p302 = por %p300, %p301
      %p303 = scmp.ne.s32.totalorder %s292, %s293
      %p304 = scmp.eq.s32.totalorder %s27, 0
      %p305 = por %p303, %p304
      %p306 = scmp.ne.s32.totalorder %s292, %s293
      %p307 = scmp.eq.s32.totalorder %s28, 1
      %p308 = por %p306, %p307
      %p310 = scmp.ne.s32.totalorder %s293, %s309
      %p311 = scmp.eq.s32.totalorder %s28, 0
      %p312 = por %p310, %p311
      %p313 = scmp.le.s32.totalorder 1, %s22
      %p314 = scmp.lt.s32.totalorder %s22, 3
      %p315 = pnand %p313, %p314
      %p316 = pneg %p315
      // Predicated region
      $region9: #{bottleneck_lska_forward.1} parent=5 // pred_check
        _
      $region10: #{bottleneck_lska_forward.1} parent=5 // pred_check_branch
        %318 = sbr.rel (%p315) target = $region12
      $region11: #{bottleneck_lska_forward.1} parent=5 // pred_region
        %s319 = ssub.s32 %s22, 1
        // Predicated region
        $region13: #{bottleneck_lska_forward.1} parent=11 // pred_check
          %p320 = pneg %p69
        $region14: #{bottleneck_lska_forward.1} parent=11 // pred_check_branch
          %322 = sbr.rel (%p320) target = $region16
        $region15: #{bottleneck_lska_forward.1} parent=11 // pred_region
          %s324 = ssub.s32 1024, 1024
          %325 = vsyncadd [#allocation3], %s324
          %s326 = sshll.u32 [#allocation2], 4
          %s327 = int_to_ptr.vmem [resolvable:$true] %s326
          %332 = dma.hbm_to_vmem [thread:$0]  %s1, 1024, %s327, [#allocation3], 128, 128, 8
        $region16: #{bottleneck_lska_forward.1} parent=11 // pred_fallthru
          _
        // Predicated region
        $region17: #{bottleneck_lska_forward.1} parent=11 // pred_check
          %p333 = pneg %p90
        $region18: #{bottleneck_lska_forward.1} parent=11 // pred_check_branch
          %335 = sbr.rel (%p333) target = $region20
        $region19: #{bottleneck_lska_forward.1} parent=11 // pred_region
          _
        $region20: #{bottleneck_lska_forward.1} parent=11 // pred_fallthru
          _
        // Predicated region
        $region21: #{bottleneck_lska_forward.1} parent=11 // pred_check
          %p336 = pneg %p111
        $region22: #{bottleneck_lska_forward.1} parent=11 // pred_check_branch
          %338 = sbr.rel (%p336) target = $region24
        $region23: #{bottleneck_lska_forward.1} parent=11 // pred_region
          %s340 = ssub.s32 1024, 1024
          %341 = vsyncadd [#allocation5], %s340
          %s342 = sshll.u32 [#allocation4], 4
          %s343 = int_to_ptr.vmem [resolvable:$true] %s342
          %348 = dma.hbm_to_vmem [thread:$0]  %s3, 1024, %s343, [#allocation5], 128, 128, 8
        $region24: #{bottleneck_lska_forward.1} parent=11 // pred_fallthru
          _
        // Predicated region
        $region25: #{bottleneck_lska_forward.1} parent=11 // pred_check
          %p349 = pneg %p132
        $region26: #{bottleneck_lska_forward.1} parent=11 // pred_check_branch
          %351 = sbr.rel (%p349) target = $region28
        $region27: #{bottleneck_lska_forward.1} parent=11 // pred_region
          _
        $region28: #{bottleneck_lska_forward.1} parent=11 // pred_fallthru
          _
        // Predicated region
        $region29: #{bottleneck_lska_forward.1} parent=11 // pred_check
          %p352 = pneg %p153
        $region30: #{bottleneck_lska_forward.1} parent=11 // pred_check_branch
          %354 = sbr.rel (%p352) target = $region32
        $region31: #{bottleneck_lska_forward.1} parent=11 // pred_region
          _
        $region32: #{bottleneck_lska_forward.1} parent=11 // pred_fallthru
          _
        // Predicated region
        $region33: #{bottleneck_lska_forward.1} parent=11 // pred_check
          %p355 = pneg %p174
        $region34: #{bottleneck_lska_forward.1} parent=11 // pred_check_branch
          %357 = sbr.rel (%p355) target = $region36
        $region35: #{bottleneck_lska_forward.1} parent=11 // pred_region
          %s359 = ssub.s32 8192, 8192
          %360 = vsyncadd [#allocation5], %s359
          %s361 = sshll.u32 [#allocation6], 4
          %s362 = int_to_ptr.vmem [resolvable:$true] %s361
          %367 = dma.hbm_to_vmem [thread:$0]  %s6, 8192, %s362, [#allocation5], 256, 256, 16
        $region36: #{bottleneck_lska_forward.1} parent=11 // pred_fallthru
          _
        // Predicated region
        $region37: #{bottleneck_lska_forward.1} parent=11 // pred_check
          %p368 = pneg %p195
        $region38: #{bottleneck_lska_forward.1} parent=11 // pred_check_branch
          %370 = sbr.rel (%p368) target = $region40
        $region39: #{bottleneck_lska_forward.1} parent=11 // pred_region
          %s372 = ssub.s32 8192, 8192
          %373 = vsyncadd [#allocation8], %s372
          %s374 = sshll.u32 [#allocation7], 4
          %s375 = int_to_ptr.vmem [resolvable:$true] %s374
          %380 = dma.hbm_to_vmem [thread:$0]  %s7, 8192, %s375, [#allocation8], 256, 256, 16
        $region40: #{bottleneck_lska_forward.1} parent=11 // pred_fallthru
          _
        // Predicated region
        $region41: #{bottleneck_lska_forward.1} parent=11 // pred_check
          %p381 = pneg %p216
        $region42: #{bottleneck_lska_forward.1} parent=11 // pred_check_branch
          %383 = sbr.rel (%p381) target = $region44
        $region43: #{bottleneck_lska_forward.1} parent=11 // pred_region
          %s385 = ssub.s32 8192, 8192
          %386 = vsyncadd [#allocation8], %s385
          %s387 = sshll.u32 [#allocation9], 4
          %s388 = int_to_ptr.vmem [resolvable:$true] %s387
          %393 = dma.hbm_to_vmem [thread:$0]  %s8, 8192, %s388, [#allocation8], 256, 256, 16
        $region44: #{bottleneck_lska_forward.1} parent=11 // pred_fallthru
          _
        // Predicated region
        $region45: #{bottleneck_lska_forward.1} parent=11 // pred_check
          %p394 = pneg %p237
        $region46: #{bottleneck_lska_forward.1} parent=11 // pred_check_branch
          %396 = sbr.rel (%p394) target = $region48
        $region47: #{bottleneck_lska_forward.1} parent=11 // pred_region
          %s398 = ssub.s32 256, 256
          %399 = vsyncadd [#allocation11], %s398
          %s401 = sshll.u32 [#allocation10], 4
          %s402 = int_to_ptr.vmem [resolvable:$true] %s401
          %404 = dma.hbm_to_vmem [thread:$0]  %s9, 256, %s402, [#allocation11]
        $region48: #{bottleneck_lska_forward.1} parent=11 // pred_fallthru
          _
        // Predicated region
        $region49: #{bottleneck_lska_forward.1} parent=11 // pred_check
          %p405 = pneg %p258
        $region50: #{bottleneck_lska_forward.1} parent=11 // pred_check_branch
          %407 = sbr.rel (%p405) target = $region52
        $region51: #{bottleneck_lska_forward.1} parent=11 // pred_region
          _
        $region52: #{bottleneck_lska_forward.1} parent=11 // pred_fallthru
          _
        // Predicated region
        $region53: #{bottleneck_lska_forward.1} parent=11 // pred_check
          %p408 = pneg %p279
        $region54: #{bottleneck_lska_forward.1} parent=11 // pred_check_branch
          %410 = sbr.rel (%p408) target = $region56
        $region55: #{bottleneck_lska_forward.1} parent=11 // pred_region
          %s412 = ssub.s32 256, 256
          %413 = vsyncadd [#allocation11], %s412
          %s415 = sshll.u32 [#allocation12], 4
          %s416 = int_to_ptr.vmem [resolvable:$true] %s415
          %418 = dma.hbm_to_vmem [thread:$0]  %s11, 256, %s416, [#allocation11]
        $region56: #{bottleneck_lska_forward.1} parent=11 // pred_fallthru
          _
      $region12: #{bottleneck_lska_forward.1} parent=5 // pred_fallthru
        _
      %p419 = scmp.lt.s32.totalorder %s22, 2
      // Predicated region
      $region57: #{bottleneck_lska_forward.1} parent=5 // pred_check
        %p420 = pneg %p419
      $region58: #{bottleneck_lska_forward.1} parent=5 // pred_check_branch
        %422 = sbr.rel (%p420) target = $region60
      $region59: #{bottleneck_lska_forward.1} parent=5 // pred_region
        // Predicated region
        $region61: #{bottleneck_lska_forward.1} parent=59 // pred_check
          %p423 = pneg %p42
        $region62: #{bottleneck_lska_forward.1} parent=59 // pred_check_branch
          %425 = sbr.rel (%p423) target = $region64
        $region63: #{bottleneck_lska_forward.1} parent=59 // pred_region
          %p426 = scmp.lt.s32.totalorder %s22, 1
          %s427 = scalar_select %p426, %s22, 1
          %s428 = smul.addr %s427, 2
          %s429 = smul.addr %s428, 8
          %s430 = scalar_lea.vmem %s0, %s429
        $region64: #{bottleneck_lska_forward.1} parent=59 // pred_fallthru
          _
      $region60: #{bottleneck_lska_forward.1} parent=5 // pred_fallthru
        _
      %p431 = scmp.le.s32.totalorder 1, %s22
      %p432 = scmp.lt.s32.totalorder %s22, 3
      %p433 = pnand %p431, %p432
      %p434 = pneg %p433
      // Predicated region
      $region65: #{bottleneck_lska_forward.1} parent=5 // pred_check
        _
      $region66: #{bottleneck_lska_forward.1} parent=5 // pred_check_branch
        %436 = sbr.rel (%p433) target = $region68
      $region67: #{bottleneck_lska_forward.1} parent=5 // pred_region
        %s437 = ssub.s32 %s22, 1
        // Predicated region
        $region69: #{bottleneck_lska_forward.1} parent=67 // pred_check
          %p438 = pneg %p69
        $region70: #{bottleneck_lska_forward.1} parent=67 // pred_check_branch
          %440 = sbr.rel (%p438) target = $region72
        $region71: #{bottleneck_lska_forward.1} parent=67 // pred_region
          %441 = dma.done [#allocation3], 1024
        $region72: #{bottleneck_lska_forward.1} parent=67 // pred_fallthru
          _
        // Predicated region
        $region73: #{bottleneck_lska_forward.1} parent=67 // pred_check
          %p442 = pneg %p111
        $region74: #{bottleneck_lska_forward.1} parent=67 // pred_check_branch
          %444 = sbr.rel (%p442) target = $region76
        $region75: #{bottleneck_lska_forward.1} parent=67 // pred_region
          %445 = dma.done [#allocation5], 1024
        $region76: #{bottleneck_lska_forward.1} parent=67 // pred_fallthru
          _
        // Predicated region
        $region77: #{bottleneck_lska_forward.1} parent=67 // pred_check
          %p446 = pneg %p174
        $region78: #{bottleneck_lska_forward.1} parent=67 // pred_check_branch
          %448 = sbr.rel (%p446) target = $region80
        $region79: #{bottleneck_lska_forward.1} parent=67 // pred_region
          %449 = dma.done [#allocation5], 8192
        $region80: #{bottleneck_lska_forward.1} parent=67 // pred_fallthru
          _
        // Predicated region
        $region81: #{bottleneck_lska_forward.1} parent=67 // pred_check
          %p450 = pneg %p195
        $region82: #{bottleneck_lska_forward.1} parent=67 // pred_check_branch
          %452 = sbr.rel (%p450) target = $region84
        $region83: #{bottleneck_lska_forward.1} parent=67 // pred_region
          %453 = dma.done [#allocation8], 8192
        $region84: #{bottleneck_lska_forward.1} parent=67 // pred_fallthru
          _
        // Predicated region
        $region85: #{bottleneck_lska_forward.1} parent=67 // pred_check
          %p454 = pneg %p216
        $region86: #{bottleneck_lska_forward.1} parent=67 // pred_check_branch
          %456 = sbr.rel (%p454) target = $region88
        $region87: #{bottleneck_lska_forward.1} parent=67 // pred_region
          %457 = dma.done [#allocation8], 8192
        $region88: #{bottleneck_lska_forward.1} parent=67 // pred_fallthru
          _
        // Predicated region
        $region89: #{bottleneck_lska_forward.1} parent=67 // pred_check
          %p458 = pneg %p237
        $region90: #{bottleneck_lska_forward.1} parent=67 // pred_check_branch
          %460 = sbr.rel (%p458) target = $region92
        $region91: #{bottleneck_lska_forward.1} parent=67 // pred_region
          %461 = dma.done [#allocation11], 256
        $region92: #{bottleneck_lska_forward.1} parent=67 // pred_fallthru
          _
        // Predicated region
        $region93: #{bottleneck_lska_forward.1} parent=67 // pred_check
          %p462 = pneg %p279
        $region94: #{bottleneck_lska_forward.1} parent=67 // pred_check_branch
          %464 = sbr.rel (%p462) target = $region96
        $region95: #{bottleneck_lska_forward.1} parent=67 // pred_region
          %465 = dma.done [#allocation11], 256
        $region96: #{bottleneck_lska_forward.1} parent=67 // pred_fallthru
          _
        %p466 = scmp.lt.s32.totalorder %s27, 1
        %s467 = scalar_select %p466, %s27, 1
        %s468 = smul.addr %s467, 2
        %s469 = smul.addr %s468, 8
        %s470 = scalar_lea.vmem %s0, %s469
        %p471 = pneg %p48
        %p472 = pneg %p45
        %p473 = pneg %p69
        %p474 = pneg %p66
        %p475 = pneg %p90
        %p476 = pneg %p87
        %p477 = pneg %p111
        %p478 = pneg %p108
        %p479 = pneg %p132
        %p480 = pneg %p129
        %p481 = pneg %p153
        %p482 = pneg %p150
        %p483 = pneg %p174
        %p484 = pneg %p171
        %p485 = pneg %p195
        %p486 = pneg %p192
        %p487 = pneg %p216
        %p488 = pneg %p213
        %p489 = pneg %p237
        %p490 = pneg %p234
        %p491 = pneg %p258
        %p492 = pneg %p255
        %p493 = pneg %p279
        %p494 = pneg %p276
        %p495 = pneg %p305
        %p496 = pneg %p302
        %p497 = scmp.lt.s32.totalorder %s27, 1
        %s498 = scalar_select %p497, %s27, 1
        %s499 = smul.addr %s498, 4
        %s500 = smul.addr %s499, 8
        %s501 = scalar_lea.vmem %s12, %s500
        %p502 = scmp.lt.s32.totalorder %s27, 1
        %s503 = scalar_select %p502, %s27, 1
        %s504 = smul.addr %s503, 2
        %s505 = smul.addr %s504, 8
        %s506 = scalar_lea.vmem %s0, %s505
        %p507 = scmp.lt.s32.totalorder %s27, 1
        %s508 = scalar_select %p507, %s27, 1
        %s509 = smul.addr %s508, 4
        %s510 = smul.addr %s509, 8
        %s511 = scalar_lea.vmem %s12, %s510
        %v512 = vld [vmem:[%s506] sm:$0xff]
        %v513 = vld [vmem:[%s506 + $0x8] sm:$0xff]
        %v514 = vld [vmem:[#allocation4] sm:$0xff]
        %v515 = vld [vmem:[#allocation4 + $0x8] sm:$0xff]
        %s516 = scalar_lea.vmem [#allocation4], 16
        %v517 = vld [vmem:[%s516] sm:$0xff]
        %v518 = vld [vmem:[%s516 + $0x8] sm:$0xff]
        %s519 = scalar_lea.vmem [#allocation4], 32
        %v520 = vld [vmem:[%s519] sm:$0xff]
        %v521 = vld [vmem:[%s519 + $0x8] sm:$0xff]
        %s522 = scalar_lea.vmem [#allocation4], 48
        %v523 = vld [vmem:[%s522] sm:$0xff]
        %v524 = vld [vmem:[%s522 + $0x8] sm:$0xff]
        %v525 = vld [vmem:[#allocation10] sm:$0x3f]
        %v526 = vld [vmem:[#allocation10 + $0x8] sm:$0x3f]
        %v527 = vld [vmem:[%s10] sm:$0x3]
        %v528 = vld [vmem:[#allocation12] sm:$0x7f]
        %v529 = vld [vmem:[#allocation12 + $0x8] sm:$0x7f]
        %v530 = vld [vmem:[#allocation2] sm:$0xff]
        %v531 = vld [vmem:[#allocation2 + $0x8] sm:$0xff]
        %v532 = vld [vmem:[#allocation2 + $0x10] sm:$0xff]
        %v533 = vld [vmem:[#allocation2 + $0x18] sm:$0xff]
        %v534 = vld [vmem:[#allocation2 + $0x20] sm:$0xff]
        %v535 = vld [vmem:[#allocation2 + $0x28] sm:$0xff]
        %v536 = vld [vmem:[#allocation2 + $0x30] sm:$0xff]
        %v537 = vld [vmem:[#allocation2 + $0x38] sm:$0xff]
        %v538 = vlaneseq
        %v539 = vshrl.u32 %v538, 7
        %v540 = vsub.s32 0, %v539
        %v541 = vrot.slane %v527, %v540
        %vm542 = vcmask 523264
        %v544 = vsel %vm542, %v512, 0
        %v547 = vsel %vm542, %v513, 0
        %549 = vmatprep.subr.mxu0 0.0
        %550 = vmatpush1.msra.mxu0 %v530
        %551 = vmatprep.subr.mxu0 0.0
        %552 = vmatpush1.msra.mxu0 %v531
        %553 = vmatprep.subr.mxu0 0.0
        %554 = vmatpush1.msra.mxu0 %v532
        %555 = vmatprep.subr.mxu0 0.0
        %556 = vmatpush1.msra.mxu0 %v533
        %557 = vmatprep.subr.mxu0 0.0
        %558 = vmatpush1.msra.mxu0 %v534
        %559 = vmatprep.subr.mxu0 0.0
        %560 = vmatpush1.msra.mxu0 %v535
        %561 = vmatprep.subr.mxu0 0.0
        %562 = vmatpush1.msra.mxu0 %v536
        %563 = vmatprep.subr.mxu0 0.0
        %564 = vmatpush1.msra.mxu0 %v537
        %565 = vmatprep.subr.mxu0 0.0
        %566 = vmatpush1.msra.mxu0 0.0
        %567 = vmatprep.subr.mxu0 0.0
        %568 = vmatpush1.msra.mxu0 0.0
        %569 = vmatprep.subr.mxu0 0.0
        %570 = vmatpush1.msra.mxu0 0.0
        %571 = vmatprep.subr.mxu0 0.0
        %572 = vmatpush1.msra.mxu0 0.0
        %573 = vmatprep.subr.mxu0 0.0
        %574 = vmatpush1.msra.mxu0 0.0
        %575 = vmatprep.subr.mxu0 0.0
        %576 = vmatpush1.msra.mxu0 0.0
        %577 = vmatprep.subr.mxu0 0.0
        %578 = vmatpush1.msra.mxu0 0.0
        %579 = vmatprep.subr.mxu0 0.0
        %580 = vmatpush1.msra.mxu0 0.0
        %581 = vmatprep.subr.mxu0 0.0
        %582 = vmatpush1.msra.mxu0 0.0
        %583 = vmatprep.subr.mxu0 0.0
        %584 = vmatpush1.msra.mxu0 0.0
        %585 = vmatprep.subr.mxu0 0.0
        %586 = vmatpush1.msra.mxu0 0.0
        %587 = vmatprep.subr.mxu0 0.0
        %588 = vmatpush1.msra.mxu0 0.0
        %589 = vmatprep.subr.mxu0 0.0
        %590 = vmatpush1.msra.mxu0 0.0
        %591 = vmatprep.subr.mxu0 0.0
        %592 = vmatpush1.msra.mxu0 0.0
        %593 = vmatprep.subr.mxu0 0.0
        %594 = vmatpush1.msra.mxu0 0.0
        %595 = vmatprep.subr.mxu0 0.0
        %596 = vmatpush1.msra.mxu0 0.0
        %597 = vmatprep.subr.mxu0 0.0
        %598 = vmatpush1.msra.mxu0 0.0
        %599 = vmatprep.subr.mxu0 0.0
        %600 = vmatpush1.msra.mxu0 0.0
        %601 = vmatprep.subr.mxu0 0.0
        %602 = vmatpush1.msra.mxu0 0.0
        %603 = vmatprep.subr.mxu0 0.0
        %604 = vmatpush1.msra.mxu0 0.0
        %605 = vmatprep.subr.mxu0 0.0
        %606 = vmatpush1.msra.mxu0 0.0
        %607 = vmatprep.subr.mxu0 0.0
        %608 = vmatpush1.msra.mxu0 0.0
        %609 = vmatprep.subr.mxu0 0.0
        %610 = vmatpush1.msra.mxu0 0.0
        %611 = vmatprep.subr.mxu0 0.0
        %612 = vmatpush1.msra.mxu0 0.0
        %613 = vmatprep.mubr.f32.mxu0 0.0
        %614 = vmatmul.mubr.f32.gmra.mrb[0].mxu0 %v544
        %v615 = vpop.f32.mrb[0].mxu0
        %v616 = vadd.f32 %v541, %v615
        %v617 = vpop.f32.mrb[0].mxu0
        %618 = vmatprep.mubr.f32.mxu0 0.0
        %619 = vmatmul.mubr.f32.gmra.mrb[0].mxu0 %v547
        %v620 = vpop.f32.mrb[0].mxu0
        %v621 = vadd.f32 %v541, %v620
        %v622 = vpop.f32.mrb[0].mxu0
        %623 = vdwg.mxu0
        %v624 = vmax.f32 %v616, 0.0
        %v625 = vmax.f32 %v621, 0.0
        %s626 = scalar_lea.vmem %s2, 64
        %v627 = vld [vmem:[%s626] sm:$0xff]
        %v628 = vld [vmem:[%s626 + $0x8] sm:$0xff]
        %v629 = vld [vmem:[%s626 + $0x10] sm:$0xff]
        %v630 = vld [vmem:[%s626 + $0x18] sm:$0xff]
        %v631 = vld [vmem:[%s626 + $0x20] sm:$0xff]
        %v632 = vld [vmem:[%s626 + $0x28] sm:$0xff]
        %v633 = vld [vmem:[%s626 + $0x30] sm:$0xff]
        %v634 = vld [vmem:[%s626 + $0x38] sm:$0xff]
        %vm635 = vcmask 130048
        %v637 = vsel %vm635, %v514, 0
        %v640 = vsel %vm635, %v515, 0
        %642 = vmatprep.subr.mxu0 0.0
        %643 = vmatpush1.msra.mxu0 %v624
        %644 = vmatprep.subr.mxu0 0.0
        %645 = vmatpush1.msra.mxu0 %v625
        %646 = vmatprep.subr.mxu0 0.0
        %647 = vmatpush1.msra.mxu0 0.0
        %648 = vmatprep.subr.mxu0 0.0
        %649 = vmatpush1.msra.mxu0 0.0
        %650 = vmatprep.subr.mxu0 0.0
        %651 = vmatpush1.msra.mxu0 0.0
        %652 = vmatprep.subr.mxu0 0.0
        %653 = vmatpush1.msra.mxu0 0.0
        %654 = vmatprep.subr.mxu0 0.0
        %655 = vmatpush1.msra.mxu0 0.0
        %656 = vmatprep.subr.mxu0 0.0
        %657 = vmatpush1.msra.mxu0 0.0
        %658 = vmatprep.subr.mxu0 0.0
        %659 = vmatpush1.msra.mxu0 0.0
        %660 = vmatprep.subr.mxu0 0.0
        %661 = vmatpush1.msra.mxu0 0.0
        %662 = vmatprep.subr.mxu0 0.0
        %663 = vmatpush1.msra.mxu0 0.0
        %664 = vmatprep.subr.mxu0 0.0
        %665 = vmatpush1.msra.mxu0 0.0
        %666 = vmatprep.subr.mxu0 0.0
        %667 = vmatpush1.msra.mxu0 0.0
        %668 = vmatprep.subr.mxu0 0.0
        %669 = vmatpush1.msra.mxu0 0.0
        %670 = vmatprep.subr.mxu0 0.0
        %671 = vmatpush1.msra.mxu0 0.0
        %672 = vmatprep.subr.mxu0 0.0
        %673 = vmatpush1.msra.mxu0 0.0
        %674 = vmatprep.subr.mxu0 0.0
        %675 = vmatpush1.msra.mxu0 0.0
        %676 = vmatprep.subr.mxu0 0.0
        %677 = vmatpush1.msra.mxu0 0.0
        %678 = vmatprep.subr.mxu0 0.0
        %679 = vmatpush1.msra.mxu0 0.0
        %680 = vmatprep.subr.mxu0 0.0
        %681 = vmatpush1.msra.mxu0 0.0
        %682 = vmatprep.subr.mxu0 0.0
        %683 = vmatpush1.msra.mxu0 0.0
        %684 = vmatprep.subr.mxu0 0.0
        %685 = vmatpush1.msra.mxu0 0.0
        %686 = vmatprep.subr.mxu0 0.0
        %687 = vmatpush1.msra.mxu0 0.0
        %688 = vmatprep.subr.mxu0 0.0
        %689 = vmatpush1.msra.mxu0 0.0
        %690 = vmatprep.subr.mxu0 0.0
        %691 = vmatpush1.msra.mxu0 0.0
        %692 = vmatprep.subr.mxu0 0.0
        %693 = vmatpush1.msra.mxu0 0.0
        %694 = vmatprep.subr.mxu0 0.0
        %695 = vmatpush1.msra.mxu0 0.0
        %696 = vmatprep.subr.mxu0 0.0
        %697 = vmatpush1.msra.mxu0 0.0
        %698 = vmatprep.subr.mxu0 0.0
        %699 = vmatpush1.msra.mxu0 0.0
        %700 = vmatprep.subr.mxu0 0.0
        %701 = vmatpush1.msra.mxu0 0.0
        %702 = vmatprep.subr.mxu0 0.0
        %703 = vmatpush1.msra.mxu0 0.0
        %704 = vmatprep.subr.mxu0 0.0
        %705 = vmatpush1.msra.mxu0 0.0
        %706 = vmatprep.mubr.f32.mxu0 0.0
        %707 = vmatmul.mubr.f32.gmra.mrb[0].mxu0 %v637
        %v708 = vpop.f32.mrb[0].mxu0
        %v709 = vadd.f32 0.0, %v708
        %v710 = vpop.f32.mrb[0].mxu0
        %711 = vmatprep.mubr.f32.mxu0 0.0
        %712 = vmatmul.mubr.f32.gmra.mrb[0].mxu0 %v640
        %v713 = vpop.f32.mrb[0].mxu0
        %v714 = vadd.f32 0.0, %v713
        %v715 = vpop.f32.mrb[0].mxu0
        %716 = vdwg.mxu0
        %v717 = vld [vmem:[%s2] sm:$0xff]
        %v718 = vld [vmem:[%s2 + $0x8] sm:$0xff]
        %v719 = vld [vmem:[%s2 + $0x10] sm:$0xff]
        %v720 = vld [vmem:[%s2 + $0x18] sm:$0xff]
        %v721 = vld [vmem:[%s2 + $0x20] sm:$0xff]
        %v722 = vld [vmem:[%s2 + $0x28] sm:$0xff]
        %v723 = vld [vmem:[%s2 + $0x30] sm:$0xff]
        %v724 = vld [vmem:[%s2 + $0x38] sm:$0xff]
        %v726 = vsel %vm542, %v709, 0
        %v729 = vsel %vm542, %v714, 0
        %731 = vmatprep.subr.mxu0 0.0
        %732 = vmatpush1.msra.mxu0 %v717
        %733 = vmatprep.subr.mxu0 0.0
        %734 = vmatpush1.msra.mxu0 %v718
        %735 = vmatprep.subr.mxu0 0.0
        %736 = vmatpush1.msra.mxu0 %v719
        %737 = vmatprep.subr.mxu0 0.0
        %738 = vmatpush1.msra.mxu0 %v720
        %739 = vmatprep.subr.mxu0 0.0
        %740 = vmatpush1.msra.mxu0 %v721
        %741 = vmatprep.subr.mxu0 0.0
        %742 = vmatpush1.msra.mxu0 %v722
        %743 = vmatprep.subr.mxu0 0.0
        %744 = vmatpush1.msra.mxu0 %v723
        %745 = vmatprep.subr.mxu0 0.0
        %746 = vmatpush1.msra.mxu0 %v724
        %747 = vmatprep.subr.mxu0 0.0
        %748 = vmatpush1.msra.mxu0 0.0
        %749 = vmatprep.subr.mxu0 0.0
        %750 = vmatpush1.msra.mxu0 0.0
        %751 = vmatprep.subr.mxu0 0.0
        %752 = vmatpush1.msra.mxu0 0.0
        %753 = vmatprep.subr.mxu0 0.0
        %754 = vmatpush1.msra.mxu0 0.0
        %755 = vmatprep.subr.mxu0 0.0
        %756 = vmatpush1.msra.mxu0 0.0
        %757 = vmatprep.subr.mxu0 0.0
        %758 = vmatpush1.msra.mxu0 0.0
        %759 = vmatprep.subr.mxu0 0.0
        %760 = vmatpush1.msra.mxu0 0.0
        %761 = vmatprep.subr.mxu0 0.0
        %762 = vmatpush1.msra.mxu0 0.0
        %763 = vmatprep.subr.mxu0 0.0
        %764 = vmatpush1.msra.mxu0 0.0
        %765 = vmatprep.subr.mxu0 0.0
        %766 = vmatpush1.msra.mxu0 0.0
        %767 = vmatprep.subr.mxu0 0.0
        %768 = vmatpush1.msra.mxu0 0.0
        %769 = vmatprep.subr.mxu0 0.0
        %770 = vmatpush1.msra.mxu0 0.0
        %771 = vmatprep.subr.mxu0 0.0
        %772 = vmatpush1.msra.mxu0 0.0
        %773 = vmatprep.subr.mxu0 0.0
        %774 = vmatpush1.msra.mxu0 0.0
        %775 = vmatprep.subr.mxu0 0.0
        %776 = vmatpush1.msra.mxu0 0.0
        %777 = vmatprep.subr.mxu0 0.0
        %778 = vmatpush1.msra.mxu0 0.0
        %779 = vmatprep.subr.mxu0 0.0
        %780 = vmatpush1.msra.mxu0 0.0
        %781 = vmatprep.subr.mxu0 0.0
        %782 = vmatpush1.msra.mxu0 0.0
        %783 = vmatprep.subr.mxu0 0.0
        %784 = vmatpush1.msra.mxu0 0.0
        %785 = vmatprep.subr.mxu0 0.0
        %786 = vmatpush1.msra.mxu0 0.0
        %787 = vmatprep.subr.mxu0 0.0
        %788 = vmatpush1.msra.mxu0 0.0
        %789 = vmatprep.subr.mxu0 0.0
        %790 = vmatpush1.msra.mxu0 0.0
        %791 = vmatprep.subr.mxu0 0.0
        %792 = vmatpush1.msra.mxu0 0.0
        %793 = vmatprep.subr.mxu0 0.0
        %794 = vmatpush1.msra.mxu0 0.0
        %795 = vmatprep.mubr.f32.mxu0 0.0
        %796 = vmatmul.mubr.f32.gmra.mrb[0].mxu0 %v726
        %v797 = vpop.f32.mrb[0].mxu0
        %v798 = vadd.f32 0.0, %v797
        %v799 = vpop.f32.mrb[0].mxu0
        %800 = vmatprep.mubr.f32.mxu0 0.0
        %801 = vmatmul.mubr.f32.gmra.mrb[0].mxu0 %v729
        %v802 = vpop.f32.mrb[0].mxu0
        %v803 = vadd.f32 0.0, %v802
        %v804 = vpop.f32.mrb[0].mxu0
        %805 = vdwg.mxu0
        %v807 = vsel %vm542, %v624, 0
        %v810 = vsel %vm542, %v625, 0
        %812 = vmatprep.subr.mxu0 0.0
        %813 = vmatpush1.msra.mxu0 %v627
        %814 = vmatprep.subr.mxu0 0.0
        %815 = vmatpush1.msra.mxu0 %v628
        %816 = vmatprep.subr.mxu0 0.0
        %817 = vmatpush1.msra.mxu0 %v629
        %818 = vmatprep.subr.mxu0 0.0
        %819 = vmatpush1.msra.mxu0 %v630
        %820 = vmatprep.subr.mxu0 0.0
        %821 = vmatpush1.msra.mxu0 %v631
        %822 = vmatprep.subr.mxu0 0.0
        %823 = vmatpush1.msra.mxu0 %v632
        %824 = vmatprep.subr.mxu0 0.0
        %825 = vmatpush1.msra.mxu0 %v633
        %826 = vmatprep.subr.mxu0 0.0
        %827 = vmatpush1.msra.mxu0 %v634
        %828 = vmatprep.subr.mxu0 0.0
        %829 = vmatpush1.msra.mxu0 0.0
        %830 = vmatprep.subr.mxu0 0.0
        %831 = vmatpush1.msra.mxu0 0.0
        %832 = vmatprep.subr.mxu0 0.0
        %833 = vmatpush1.msra.mxu0 0.0
        %834 = vmatprep.subr.mxu0 0.0
        %835 = vmatpush1.msra.mxu0 0.0
        %836 = vmatprep.subr.mxu0 0.0
        %837 = vmatpush1.msra.mxu0 0.0
        %838 = vmatprep.subr.mxu0 0.0
        %839 = vmatpush1.msra.mxu0 0.0
        %840 = vmatprep.subr.mxu0 0.0
        %841 = vmatpush1.msra.mxu0 0.0
        %842 = vmatprep.subr.mxu0 0.0
        %843 = vmatpush1.msra.mxu0 0.0
        %844 = vmatprep.subr.mxu0 0.0
        %845 = vmatpush1.msra.mxu0 0.0
        %846 = vmatprep.subr.mxu0 0.0
        %847 = vmatpush1.msra.mxu0 0.0
        %848 = vmatprep.subr.mxu0 0.0
        %849 = vmatpush1.msra.mxu0 0.0
        %850 = vmatprep.subr.mxu0 0.0
        %851 = vmatpush1.msra.mxu0 0.0
        %852 = vmatprep.subr.mxu0 0.0
        %853 = vmatpush1.msra.mxu0 0.0
        %854 = vmatprep.subr.mxu0 0.0
        %855 = vmatpush1.msra.mxu0 0.0
        %856 = vmatprep.subr.mxu0 0.0
        %857 = vmatpush1.msra.mxu0 0.0
        %858 = vmatprep.subr.mxu0 0.0
        %859 = vmatpush1.msra.mxu0 0.0
        %860 = vmatprep.subr.mxu0 0.0
        %861 = vmatpush1.msra.mxu0 0.0
        %862 = vmatprep.subr.mxu0 0.0
        %863 = vmatpush1.msra.mxu0 0.0
        %864 = vmatprep.subr.mxu0 0.0
        %865 = vmatpush1.msra.mxu0 0.0
        %866 = vmatprep.subr.mxu0 0.0
        %867 = vmatpush1.msra.mxu0 0.0
        %868 = vmatprep.subr.mxu0 0.0
        %869 = vmatpush1.msra.mxu0 0.0
        %870 = vmatprep.subr.mxu0 0.0
        %871 = vmatpush1.msra.mxu0 0.0
        %872 = vmatprep.subr.mxu0 0.0
        %873 = vmatpush1.msra.mxu0 0.0
        %874 = vmatprep.subr.mxu0 0.0
        %875 = vmatpush1.msra.mxu0 0.0
        %876 = vmatprep.mubr.f32.mxu0 0.0
        %877 = vmatmul.mubr.f32.gmra.mrb[0].mxu0 %v807
        %v878 = vpop.f32.mrb[0].mxu0
        %v879 = vadd.f32 %v798, %v878
        %v880 = vpop.f32.mrb[0].mxu0
        %881 = vmatprep.mubr.f32.mxu0 0.0
        %882 = vmatmul.mubr.f32.gmra.mrb[0].mxu0 %v810
        %v883 = vpop.f32.mrb[0].mxu0
        %v884 = vadd.f32 %v803, %v883
        %v885 = vpop.f32.mrb[0].mxu0
        %886 = vdwg.mxu0
        %v888 = vsel %vm635, %v517, 0
        %v891 = vsel %vm635, %v518, 0
        %893 = vmatprep.subr.mxu0 0.0
        %894 = vmatpush1.msra.mxu0 %v624
        %895 = vmatprep.subr.mxu0 0.0
        %896 = vmatpush1.msra.mxu0 %v625
        %897 = vmatprep.subr.mxu0 0.0
        %898 = vmatpush1.msra.mxu0 0.0
        %899 = vmatprep.subr.mxu0 0.0
        %900 = vmatpush1.msra.mxu0 0.0
        %901 = vmatprep.subr.mxu0 0.0
        %902 = vmatpush1.msra.mxu0 0.0
        %903 = vmatprep.subr.mxu0 0.0
        %904 = vmatpush1.msra.mxu0 0.0
        %905 = vmatprep.subr.mxu0 0.0
        %906 = vmatpush1.msra.mxu0 0.0
        %907 = vmatprep.subr.mxu0 0.0
        %908 = vmatpush1.msra.mxu0 0.0
        %909 = vmatprep.subr.mxu0 0.0
        %910 = vmatpush1.msra.mxu0 0.0
        %911 = vmatprep.subr.mxu0 0.0
        %912 = vmatpush1.msra.mxu0 0.0
        %913 = vmatprep.subr.mxu0 0.0
        %914 = vmatpush1.msra.mxu0 0.0
        %915 = vmatprep.subr.mxu0 0.0
        %916 = vmatpush1.msra.mxu0 0.0
        %917 = vmatprep.subr.mxu0 0.0
        %918 = vmatpush1.msra.mxu0 0.0
        %919 = vmatprep.subr.mxu0 0.0
        %920 = vmatpush1.msra.mxu0 0.0
        %921 = vmatprep.subr.mxu0 0.0
        %922 = vmatpush1.msra.mxu0 0.0
        %923 = vmatprep.subr.mxu0 0.0
        %924 = vmatpush1.msra.mxu0 0.0
        %925 = vmatprep.subr.mxu0 0.0
        %926 = vmatpush1.msra.mxu0 0.0
        %927 = vmatprep.subr.mxu0 0.0
        %928 = vmatpush1.msra.mxu0 0.0
        %929 = vmatprep.subr.mxu0 0.0
        %930 = vmatpush1.msra.mxu0 0.0
        %931 = vmatprep.subr.mxu0 0.0
        %932 = vmatpush1.msra.mxu0 0.0
        %933 = vmatprep.subr.mxu0 0.0
        %934 = vmatpush1.msra.mxu0 0.0
        %935 = vmatprep.subr.mxu0 0.0
        %936 = vmatpush1.msra.mxu0 0.0
        %937 = vmatprep.subr.mxu0 0.0
        %938 = vmatpush1.msra.mxu0 0.0
        %939 = vmatprep.subr.mxu0 0.0
        %940 = vmatpush1.msra.mxu0 0.0
        %941 = vmatprep.subr.mxu0 0.0
        %942 = vmatpush1.msra.mxu0 0.0
        %943 = vmatprep.subr.mxu0 0.0
        %944 = vmatpush1.msra.mxu0 0.0
        %945 = vmatprep.subr.mxu0 0.0
        %946 = vmatpush1.msra.mxu0 0.0
        %947 = vmatprep.subr.mxu0 0.0
        %948 = vmatpush1.msra.mxu0 0.0
        %949 = vmatprep.subr.mxu0 0.0
        %950 = vmatpush1.msra.mxu0 0.0
        %951 = vmatprep.subr.mxu0 0.0
        %952 = vmatpush1.msra.mxu0 0.0
        %953 = vmatprep.subr.mxu0 0.0
        %954 = vmatpush1.msra.mxu0 0.0
        %955 = vmatprep.subr.mxu0 0.0
        %956 = vmatpush1.msra.mxu0 0.0
        %957 = vmatprep.mubr.f32.mxu0 0.0
        %958 = vmatmul.mubr.f32.gmra.mrb[0].mxu0 %v888
        %v959 = vpop.f32.mrb[0].mxu0
        %v960 = vadd.f32 0.0, %v959
        %v961 = vpop.f32.mrb[0].mxu0
        %962 = vmatprep.mubr.f32.mxu0 0.0
        %963 = vmatmul.mubr.f32.gmra.mrb[0].mxu0 %v891
        %v964 = vpop.f32.mrb[0].mxu0
        %v965 = vadd.f32 0.0, %v964
        %v966 = vpop.f32.mrb[0].mxu0
        %967 = vdwg.mxu0
        %s968 = scalar_lea.vmem %s2, 128
        %v969 = vld [vmem:[%s968] sm:$0xff]
        %v970 = vld [vmem:[%s968 + $0x8] sm:$0xff]
        %v971 = vld [vmem:[%s968 + $0x10] sm:$0xff]
        %v972 = vld [vmem:[%s968 + $0x18] sm:$0xff]
        %v973 = vld [vmem:[%s968 + $0x20] sm:$0xff]
        %v974 = vld [vmem:[%s968 + $0x28] sm:$0xff]
        %v975 = vld [vmem:[%s968 + $0x30] sm:$0xff]
        %v976 = vld [vmem:[%s968 + $0x38] sm:$0xff]
        %v978 = vsel %vm542, %v960, 0
        %v981 = vsel %vm542, %v965, 0
        %983 = vmatprep.subr.mxu0 0.0
        %984 = vmatpush1.msra.mxu0 %v969
        %985 = vmatprep.subr.mxu0 0.0
        %986 = vmatpush1.msra.mxu0 %v970
        %987 = vmatprep.subr.mxu0 0.0
        %988 = vmatpush1.msra.mxu0 %v971
        %989 = vmatprep.subr.mxu0 0.0
        %990 = vmatpush1.msra.mxu0 %v972
        %991 = vmatprep.subr.mxu0 0.0
        %992 = vmatpush1.msra.mxu0 %v973
        %993 = vmatprep.subr.mxu0 0.0
        %994 = vmatpush1.msra.mxu0 %v974
        %995 = vmatprep.subr.mxu0 0.0
        %996 = vmatpush1.msra.mxu0 %v975
        %997 = vmatprep.subr.mxu0 0.0
        %998 = vmatpush1.msra.mxu0 %v976
        %999 = vmatprep.subr.mxu0 0.0
        %1000 = vmatpush1.msra.mxu0 0.0
        %1001 = vmatprep.subr.mxu0 0.0
        %1002 = vmatpush1.msra.mxu0 0.0
        %1003 = vmatprep.subr.mxu0 0.0
        %1004 = vmatpush1.msra.mxu0 0.0
        %1005 = vmatprep.subr.mxu0 0.0
        %1006 = vmatpush1.msra.mxu0 0.0
        %1007 = vmatprep.subr.mxu0 0.0
        %1008 = vmatpush1.msra.mxu0 0.0
        %1009 = vmatprep.subr.mxu0 0.0
        %1010 = vmatpush1.msra.mxu0 0.0
        %1011 = vmatprep.subr.mxu0 0.0
        %1012 = vmatpush1.msra.mxu0 0.0
        %1013 = vmatprep.subr.mxu0 0.0
        %1014 = vmatpush1.msra.mxu0 0.0
        %1015 = vmatprep.subr.mxu0 0.0
        %1016 = vmatpush1.msra.mxu0 0.0
        %1017 = vmatprep.subr.mxu0 0.0
        %1018 = vmatpush1.msra.mxu0 0.0
        %1019 = vmatprep.subr.mxu0 0.0
        %1020 = vmatpush1.msra.mxu0 0.0
        %1021 = vmatprep.subr.mxu0 0.0
        %1022 = vmatpush1.msra.mxu0 0.0
        %1023 = vmatprep.subr.mxu0 0.0
        %1024 = vmatpush1.msra.mxu0 0.0
        %1025 = vmatprep.subr.mxu0 0.0
        %1026 = vmatpush1.msra.mxu0 0.0
        %1027 = vmatprep.subr.mxu0 0.0
        %1028 = vmatpush1.msra.mxu0 0.0
        %1029 = vmatprep.subr.mxu0 0.0
        %1030 = vmatpush1.msra.mxu0 0.0
        %1031 = vmatprep.subr.mxu0 0.0
        %1032 = vmatpush1.msra.mxu0 0.0
        %1033 = vmatprep.subr.mxu0 0.0
        %1034 = vmatpush1.msra.mxu0 0.0
        %1035 = vmatprep.subr.mxu0 0.0
        %1036 = vmatpush1.msra.mxu0 0.0
        %1037 = vmatprep.subr.mxu0 0.0
        %1038 = vmatpush1.msra.mxu0 0.0
        %1039 = vmatprep.subr.mxu0 0.0
        %1040 = vmatpush1.msra.mxu0 0.0
        %1041 = vmatprep.subr.mxu0 0.0
        %1042 = vmatpush1.msra.mxu0 0.0
        %1043 = vmatprep.subr.mxu0 0.0
        %1044 = vmatpush1.msra.mxu0 0.0
        %1045 = vmatprep.subr.mxu0 0.0
        %1046 = vmatpush1.msra.mxu0 0.0
        %1047 = vmatprep.mubr.f32.mxu0 0.0
        %1048 = vmatmul.mubr.f32.gmra.mrb[0].mxu0 %v978
        %v1049 = vpop.f32.mrb[0].mxu0
        %v1050 = vadd.f32 0.0, %v1049
        %v1051 = vpop.f32.mrb[0].mxu0
        %1052 = vmatprep.mubr.f32.mxu0 0.0
        %1053 = vmatmul.mubr.f32.gmra.mrb[0].mxu0 %v981
        %v1054 = vpop.f32.mrb[0].mxu0
        %v1055 = vadd.f32 0.0, %v1054
        %v1056 = vpop.f32.mrb[0].mxu0
        %1057 = vdwg.mxu0
        %v1058 = vadd.f32 %v879, %v1050
        %v1059 = vadd.f32 %v884, %v1055
        %v1060 = vlaneseq
        %v1061 = vshrl.u32 %v1060, 7
        %v1062 = vsub.s32 1, %v1061
        %v1063 = vrot.slane %v527, %v1062
        %v1064 = vadd.f32 %v1058, %v1063
        %v1065 = vadd.f32 %v1059, %v1063
        %v1066 = vmax.f32 %v1064, 0.0
        %v1067 = vmax.f32 %v1065, 0.0
        %v1068 = vld [vmem:[%s4] sm:$0xff]
        %v1069 = vld [vmem:[%s4 + $0x8] sm:$0xff]
        %v1070 = vld [vmem:[%s4 + $0x10] sm:$0xff]
        %v1071 = vld [vmem:[%s4 + $0x18] sm:$0xff]
        %v1072 = vld [vmem:[%s4 + $0x20] sm:$0xff]
        %v1073 = vld [vmem:[%s4 + $0x28] sm:$0xff]
        %v1074 = vld [vmem:[%s4 + $0x30] sm:$0xff]
        %v1075 = vld [vmem:[%s4 + $0x38] sm:$0xff]
        %v1076 = vld [vmem:[%s4 + $0x40] sm:$0xff]
        %v1077 = vld [vmem:[%s4 + $0x48] sm:$0xff]
        %v1078 = vld [vmem:[%s4 + $0x50] sm:$0xff]
        %v1079 = vld [vmem:[%s4 + $0x58] sm:$0xff]
        %v1080 = vld [vmem:[%s4 + $0x60] sm:$0xff]
        %v1081 = vld [vmem:[%s4 + $0x68] sm:$0xff]
        %v1082 = vld [vmem:[%s4 + $0x70] sm:$0xff]
        %v1083 = vld [vmem:[%s4 + $0x78] sm:$0xff]
        %v1084 = vlaneseq
        %v1085 = vshrl.u32 %v1084, 7
        %v1086 = vsub.s32 0, %v1085
        %v1087 = vrot.slane %v528, %v1086
        %v1088 = vlaneseq
        %v1089 = vshrl.u32 %v1088, 7
        %v1090 = vsub.s32 0, %v1089
        %v1091 = vrot.slane %v529, %v1090
        %v1093 = vsel %vm542, %v1066, 0
        %v1096 = vsel %vm542, %v1067, 0
        %1098 = vmatprep.subr.mxu0 %v1069
        %1099 = vmatpush1.msra.mxu0 %v1068
        %1100 = vmatprep.subr.mxu0 %v1071
        %1101 = vmatpush1.msra.mxu0 %v1070
        %1102 = vmatprep.subr.mxu0 %v1073
        %1103 = vmatpush1.msra.mxu0 %v1072
        %1104 = vmatprep.subr.mxu0 %v1075
        %1105 = vmatpush1.msra.mxu0 %v1074
        %1106 = vmatprep.subr.mxu0 %v1077
        %1107 = vmatpush1.msra.mxu0 %v1076
        %1108 = vmatprep.subr.mxu0 %v1079
        %1109 = vmatpush1.msra.mxu0 %v1078
        %1110 = vmatprep.subr.mxu0 %v1081
        %1111 = vmatpush1.msra.mxu0 %v1080
        %1112 = vmatprep.subr.mxu0 %v1083
        %1113 = vmatpush1.msra.mxu0 %v1082
        %1114 = vmatprep.subr.mxu0 0.0
        %1115 = vmatpush1.msra.mxu0 0.0
        %1116 = vmatprep.subr.mxu0 0.0
        %1117 = vmatpush1.msra.mxu0 0.0
        %1118 = vmatprep.subr.mxu0 0.0
        %1119 = vmatpush1.msra.mxu0 0.0
        %1120 = vmatprep.subr.mxu0 0.0
        %1121 = vmatpush1.msra.mxu0 0.0
        %1122 = vmatprep.subr.mxu0 0.0
        %1123 = vmatpush1.msra.mxu0 0.0
        %1124 = vmatprep.subr.mxu0 0.0
        %1125 = vmatpush1.msra.mxu0 0.0
        %1126 = vmatprep.subr.mxu0 0.0
        %1127 = vmatpush1.msra.mxu0 0.0
        %1128 = vmatprep.subr.mxu0 0.0
        %1129 = vmatpush1.msra.mxu0 0.0
        %1130 = vmatprep.subr.mxu0 0.0
        %1131 = vmatpush1.msra.mxu0 0.0
        %1132 = vmatprep.subr.mxu0 0.0
        %1133 = vmatpush1.msra.mxu0 0.0
        %1134 = vmatprep.subr.mxu0 0.0
        %1135 = vmatpush1.msra.mxu0 0.0
        %1136 = vmatprep.subr.mxu0 0.0
        %1137 = vmatpush1.msra.mxu0 0.0
        %1138 = vmatprep.subr.mxu0 0.0
        %1139 = vmatpush1.msra.mxu0 0.0
        %1140 = vmatprep.subr.mxu0 0.0
        %1141 = vmatpush1.msra.mxu0 0.0
        %1142 = vmatprep.subr.mxu0 0.0
        %1143 = vmatpush1.msra.mxu0 0.0
        %1144 = vmatprep.subr.mxu0 0.0
        %1145 = vmatpush1.msra.mxu0 0.0
        %1146 = vmatprep.subr.mxu0 0.0
        %1147 = vmatpush1.msra.mxu0 0.0
        %1148 = vmatprep.subr.mxu0 0.0
        %1149 = vmatpush1.msra.mxu0 0.0
        %1150 = vmatprep.subr.mxu0 0.0
        %1151 = vmatpush1.msra.mxu0 0.0
        %1152 = vmatprep.subr.mxu0 0.0
        %1153 = vmatpush1.msra.mxu0 0.0
        %1154 = vmatprep.subr.mxu0 0.0
        %1155 = vmatpush1.msra.mxu0 0.0
        %1156 = vmatprep.subr.mxu0 0.0
        %1157 = vmatpush1.msra.mxu0 0.0
        %1158 = vmatprep.subr.mxu0 0.0
        %1159 = vmatpush1.msra.mxu0 0.0
        %1160 = vmatprep.subr.mxu0 0.0
        %1161 = vmatpush1.msra.mxu0 0.0
        %1162 = vmatprep.mubr.f32.mxu0 0.0
        %1163 = vmatmul.mubr.f32.gmra.mrb[0].mxu0 %v1093
        %v1164 = vpop.f32.mrb[0].mxu0
        %v1165 = vadd.f32 %v1087, %v1164
        %v1166 = vpop.f32.mrb[0].mxu0
        %v1167 = vadd.f32 %v1091, %v1166
        %1168 = vmatprep.mubr.f32.mxu0 0.0
        %1169 = vmatmul.mubr.f32.gmra.mrb[0].mxu0 %v1096
        %v1170 = vpop.f32.mrb[0].mxu0
        %v1171 = vadd.f32 %v1087, %v1170
        %v1172 = vpop.f32.mrb[0].mxu0
        %v1173 = vadd.f32 %v1091, %v1172
        %1174 = vdwg.mxu0
        %v1175 = vld [vmem:[%s5] sm:$0xff]
        %v1176 = vld [vmem:[%s5 + $0x8] sm:$0xff]
        %v1177 = vld [vmem:[%s5 + $0x10] sm:$0xff]
        %v1178 = vld [vmem:[%s5 + $0x18] sm:$0xff]
        %v1179 = vld [vmem:[%s5 + $0x20] sm:$0xff]
        %v1180 = vld [vmem:[%s5 + $0x28] sm:$0xff]
        %v1181 = vld [vmem:[%s5 + $0x30] sm:$0xff]
        %v1182 = vld [vmem:[%s5 + $0x38] sm:$0xff]
        %v1183 = vld [vmem:[%s5 + $0x40] sm:$0xff]
        %v1184 = vld [vmem:[%s5 + $0x48] sm:$0xff]
        %v1185 = vld [vmem:[%s5 + $0x50] sm:$0xff]
        %v1186 = vld [vmem:[%s5 + $0x58] sm:$0xff]
        %v1187 = vld [vmem:[%s5 + $0x60] sm:$0xff]
        %v1188 = vld [vmem:[%s5 + $0x68] sm:$0xff]
        %v1189 = vld [vmem:[%s5 + $0x70] sm:$0xff]
        %v1190 = vld [vmem:[%s5 + $0x78] sm:$0xff]
        %v1191 = vlaneseq
        %v1192 = vshrl.u32 %v1191, 7
        %v1193 = vsub.s32 1, %v1192
        %v1194 = vrot.slane %v528, %v1193
        %v1195 = vlaneseq
        %v1196 = vshrl.u32 %v1195, 7
        %v1197 = vsub.s32 1, %v1196
        %v1198 = vrot.slane %v529, %v1197
        %1199 = vmatprep.subr.mxu0 %v1176
        %1200 = vmatpush1.msra.mxu0 %v1175
        %1201 = vmatprep.subr.mxu0 %v1178
        %1202 = vmatpush1.msra.mxu0 %v1177
        %1203 = vmatprep.subr.mxu0 %v1180
        %1204 = vmatpush1.msra.mxu0 %v1179
        %1205 = vmatprep.subr.mxu0 %v1182
        %1206 = vmatpush1.msra.mxu0 %v1181
        %1207 = vmatprep.subr.mxu0 %v1184
        %1208 = vmatpush1.msra.mxu0 %v1183
        %1209 = vmatprep.subr.mxu0 %v1186
        %1210 = vmatpush1.msra.mxu0 %v1185
        %1211 = vmatprep.subr.mxu0 %v1188
        %1212 = vmatpush1.msra.mxu0 %v1187
        %1213 = vmatprep.subr.mxu0 %v1190
        %1214 = vmatpush1.msra.mxu0 %v1189
        %1215 = vmatprep.subr.mxu0 0.0
        %1216 = vmatpush1.msra.mxu0 0.0
        %1217 = vmatprep.subr.mxu0 0.0
        %1218 = vmatpush1.msra.mxu0 0.0
        %1219 = vmatprep.subr.mxu0 0.0
        %1220 = vmatpush1.msra.mxu0 0.0
        %1221 = vmatprep.subr.mxu0 0.0
        %1222 = vmatpush1.msra.mxu0 0.0
        %1223 = vmatprep.subr.mxu0 0.0
        %1224 = vmatpush1.msra.mxu0 0.0
        %1225 = vmatprep.subr.mxu0 0.0
        %1226 = vmatpush1.msra.mxu0 0.0
        %1227 = vmatprep.subr.mxu0 0.0
        %1228 = vmatpush1.msra.mxu0 0.0
        %1229 = vmatprep.subr.mxu0 0.0
        %1230 = vmatpush1.msra.mxu0 0.0
        %1231 = vmatprep.subr.mxu0 0.0
        %1232 = vmatpush1.msra.mxu0 0.0
        %1233 = vmatprep.subr.mxu0 0.0
        %1234 = vmatpush1.msra.mxu0 0.0
        %1235 = vmatprep.subr.mxu0 0.0
        %1236 = vmatpush1.msra.mxu0 0.0
        %1237 = vmatprep.subr.mxu0 0.0
        %1238 = vmatpush1.msra.mxu0 0.0
        %1239 = vmatprep.subr.mxu0 0.0
        %1240 = vmatpush1.msra.mxu0 0.0
        %1241 = vmatprep.subr.mxu0 0.0
        %1242 = vmatpush1.msra.mxu0 0.0
        %1243 = vmatprep.subr.mxu0 0.0
        %1244 = vmatpush1.msra.mxu0 0.0
        %1245 = vmatprep.subr.mxu0 0.0
        %1246 = vmatpush1.msra.mxu0 0.0
        %1247 = vmatprep.subr.mxu0 0.0
        %1248 = vmatpush1.msra.mxu0 0.0
        %1249 = vmatprep.subr.mxu0 0.0
        %1250 = vmatpush1.msra.mxu0 0.0
        %1251 = vmatprep.subr.mxu0 0.0
        %1252 = vmatpush1.msra.mxu0 0.0
        %1253 = vmatprep.subr.mxu0 0.0
        %1254 = vmatpush1.msra.mxu0 0.0
        %1255 = vmatprep.subr.mxu0 0.0
        %1256 = vmatpush1.msra.mxu0 0.0
        %1257 = vmatprep.subr.mxu0 0.0
        %1258 = vmatpush1.msra.mxu0 0.0
        %1259 = vmatprep.subr.mxu0 0.0
        %1260 = vmatpush1.msra.mxu0 0.0
        %1261 = vmatprep.subr.mxu0 0.0
        %1262 = vmatpush1.msra.mxu0 0.0
        %1263 = vmatprep.mubr.f32.mxu0 0.0
        %1264 = vmatmul.mubr.f32.gmra.mrb[0].mxu0 %v544
        %v1265 = vpop.f32.mrb[0].mxu0
        %v1266 = vadd.f32 %v1194, %v1265
        %v1267 = vpop.f32.mrb[0].mxu0
        %v1268 = vadd.f32 %v1198, %v1267
        %1269 = vmatprep.mubr.f32.mxu0 0.0
        %1270 = vmatmul.mubr.f32.gmra.mrb[0].mxu0 %v547
        %v1271 = vpop.f32.mrb[0].mxu0
        %v1272 = vadd.f32 %v1194, %v1271
        %v1273 = vpop.f32.mrb[0].mxu0
        %v1274 = vadd.f32 %v1198, %v1273
        %1275 = vdwg.mxu0
        %v1276 = vld [vmem:[#allocation6] sm:$0xff]
        %v1277 = vld [vmem:[#allocation6 + $0x8] sm:$0xff]
        %v1278 = vld [vmem:[#allocation6 + $0x10] sm:$0xff]
        %v1279 = vld [vmem:[#allocation6 + $0x18] sm:$0xff]
        %v1280 = vld [vmem:[#allocation6 + $0x20] sm:$0xff]
        %v1281 = vld [vmem:[#allocation6 + $0x28] sm:$0xff]
        %v1282 = vld [vmem:[#allocation6 + $0x30] sm:$0xff]
        %v1283 = vld [vmem:[#allocation6 + $0x38] sm:$0xff]
        %v1284 = vld [vmem:[#allocation6 + $0x40] sm:$0xff]
        %v1285 = vld [vmem:[#allocation6 + $0x48] sm:$0xff]
        %v1286 = vld [vmem:[#allocation6 + $0x50] sm:$0xff]
        %v1287 = vld [vmem:[#allocation6 + $0x58] sm:$0xff]
        %v1288 = vld [vmem:[#allocation6 + $0x60] sm:$0xff]
        %v1289 = vld [vmem:[#allocation6 + $0x68] sm:$0xff]
        %v1290 = vld [vmem:[#allocation6 + $0x70] sm:$0xff]
        %v1291 = vld [vmem:[#allocation6 + $0x78] sm:$0xff]
        %v1292 = vld [vmem:[#allocation6 + $0x80] sm:$0xff]
        %v1293 = vld [vmem:[#allocation6 + $0x88] sm:$0xff]
        %v1294 = vld [vmem:[#allocation6 + $0x90] sm:$0xff]
        %v1295 = vld [vmem:[#allocation6 + $0x98] sm:$0xff]
        %v1296 = vld [vmem:[#allocation6 + $0xa0] sm:$0xff]
        %v1297 = vld [vmem:[#allocation6 + $0xa8] sm:$0xff]
        %v1298 = vld [vmem:[#allocation6 + $0xb0] sm:$0xff]
        %v1299 = vld [vmem:[#allocation6 + $0xb8] sm:$0xff]
        %v1300 = vld [vmem:[#allocation6 + $0xc0] sm:$0xff]
        %v1301 = vld [vmem:[#allocation6 + $0xc8] sm:$0xff]
        %v1302 = vld [vmem:[#allocation6 + $0xd0] sm:$0xff]
        %v1303 = vld [vmem:[#allocation6 + $0xd8] sm:$0xff]
        %v1304 = vld [vmem:[#allocation6 + $0xe0] sm:$0xff]
        %v1305 = vld [vmem:[#allocation6 + $0xe8] sm:$0xff]
        %v1306 = vld [vmem:[#allocation6 + $0xf0] sm:$0xff]
        %v1307 = vld [vmem:[#allocation6 + $0xf8] sm:$0xff]
        %v1308 = vld [vmem:[#allocation6 + $0x100] sm:$0xff]
        %v1309 = vld [vmem:[#allocation6 + $0x108] sm:$0xff]
        %v1310 = vld [vmem:[#allocation6 + $0x110] sm:$0xff]
        %v1311 = vld [vmem:[#allocation6 + $0x118] sm:$0xff]
        %v1312 = vld [vmem:[#allocation6 + $0x120] sm:$0xff]
        %v1313 = vld [vmem:[#allocation6 + $0x128] sm:$0xff]
        %v1314 = vld [vmem:[#allocation6 + $0x130] sm:$0xff]
        %v1315 = vld [vmem:[#allocation6 + $0x138] sm:$0xff]
        %v1316 = vld [vmem:[#allocation6 + $0x140] sm:$0xff]
        %v1317 = vld [vmem:[#allocation6 + $0x148] sm:$0xff]
        %v1318 = vld [vmem:[#allocation6 + $0x150] sm:$0xff]
        %v1319 = vld [vmem:[#allocation6 + $0x158] sm:$0xff]
        %v1320 = vld [vmem:[#allocation6 + $0x160] sm:$0xff]
        %v1321 = vld [vmem:[#allocation6 + $0x168] sm:$0xff]
        %v1322 = vld [vmem:[#allocation6 + $0x170] sm:$0xff]
        %v1323 = vld [vmem:[#allocation6 + $0x178] sm:$0xff]
        %v1324 = vld [vmem:[#allocation6 + $0x180] sm:$0xff]
        %v1325 = vld [vmem:[#allocation6 + $0x188] sm:$0xff]
        %v1326 = vld [vmem:[#allocation6 + $0x190] sm:$0xff]
        %v1327 = vld [vmem:[#allocation6 + $0x198] sm:$0xff]
        %v1328 = vld [vmem:[#allocation6 + $0x1a0] sm:$0xff]
        %v1329 = vld [vmem:[#allocation6 + $0x1a8] sm:$0xff]
        %v1330 = vld [vmem:[#allocation6 + $0x1b0] sm:$0xff]
        %v1331 = vld [vmem:[#allocation6 + $0x1b8] sm:$0xff]
        %v1332 = vld [vmem:[#allocation6 + $0x1c0] sm:$0xff]
        %v1333 = vld [vmem:[#allocation6 + $0x1c8] sm:$0xff]
        %v1334 = vld [vmem:[#allocation6 + $0x1d0] sm:$0xff]
        %v1335 = vld [vmem:[#allocation6 + $0x1d8] sm:$0xff]
        %v1336 = vld [vmem:[#allocation6 + $0x1e0] sm:$0xff]
        %v1337 = vld [vmem:[#allocation6 + $0x1e8] sm:$0xff]
        %v1338 = vld [vmem:[#allocation6 + $0x1f0] sm:$0xff]
        %v1339 = vld [vmem:[#allocation6 + $0x1f8] sm:$0xff]
        %v1340 = vlaneseq
        %v1341 = vshrl.u32 %v1340, 7
        %v1342 = vsub.s32 2, %v1341
        %v1343 = vrot.slane %v528, %v1342
        %v1344 = vlaneseq
        %v1345 = vshrl.u32 %v1344, 7
        %v1346 = vsub.s32 2, %v1345
        %v1347 = vrot.slane %v529, %v1346
        %1348 = vmatprep.subr.mxu0 %v1277
        %1349 = vmatpush1.msra.mxu0 %v1276
        %1350 = vmatprep.subr.mxu0 %v1279
        %1351 = vmatpush1.msra.mxu0 %v1278
        %1352 = vmatprep.subr.mxu0 %v1281
        %1353 = vmatpush1.msra.mxu0 %v1280
        %1354 = vmatprep.subr.mxu0 %v1283
        %1355 = vmatpush1.msra.mxu0 %v1282
        %1356 = vmatprep.subr.mxu0 %v1285
        %1357 = vmatpush1.msra.mxu0 %v1284
        %1358 = vmatprep.subr.mxu0 %v1287
        %1359 = vmatpush1.msra.mxu0 %v1286
        %1360 = vmatprep.subr.mxu0 %v1289
        %1361 = vmatpush1.msra.mxu0 %v1288
        %1362 = vmatprep.subr.mxu0 %v1291
        %1363 = vmatpush1.msra.mxu0 %v1290
        %1364 = vmatprep.subr.mxu0 %v1293
        %1365 = vmatpush1.msra.mxu0 %v1292
        %1366 = vmatprep.subr.mxu0 %v1295
        %1367 = vmatpush1.msra.mxu0 %v1294
        %1368 = vmatprep.subr.mxu0 %v1297
        %1369 = vmatpush1.msra.mxu0 %v1296
        %1370 = vmatprep.subr.mxu0 %v1299
        %1371 = vmatpush1.msra.mxu0 %v1298
        %1372 = vmatprep.subr.mxu0 %v1301
        %1373 = vmatpush1.msra.mxu0 %v1300
        %1374 = vmatprep.subr.mxu0 %v1303
        %1375 = vmatpush1.msra.mxu0 %v1302
        %1376 = vmatprep.subr.mxu0 %v1305
        %1377 = vmatpush1.msra.mxu0 %v1304
        %1378 = vmatprep.subr.mxu0 %v1307
        %1379 = vmatpush1.msra.mxu0 %v1306
        %1380 = vmatprep.subr.mxu0 %v1309
        %1381 = vmatpush1.msra.mxu0 %v1308
        %1382 = vmatprep.subr.mxu0 %v1311
        %1383 = vmatpush1.msra.mxu0 %v1310
        %1384 = vmatprep.subr.mxu0 %v1313
        %1385 = vmatpush1.msra.mxu0 %v1312
        %1386 = vmatprep.subr.mxu0 %v1315
        %1387 = vmatpush1.msra.mxu0 %v1314
        %1388 = vmatprep.subr.mxu0 %v1317
        %1389 = vmatpush1.msra.mxu0 %v1316
        %1390 = vmatprep.subr.mxu0 %v1319
        %1391 = vmatpush1.msra.mxu0 %v1318
        %1392 = vmatprep.subr.mxu0 %v1321
        %1393 = vmatpush1.msra.mxu0 %v1320
        %1394 = vmatprep.subr.mxu0 %v1323
        %1395 = vmatpush1.msra.mxu0 %v1322
        %1396 = vmatprep.subr.mxu0 %v1325
        %1397 = vmatpush1.msra.mxu0 %v1324
        %1398 = vmatprep.subr.mxu0 %v1327
        %1399 = vmatpush1.msra.mxu0 %v1326
        %1400 = vmatprep.subr.mxu0 %v1329
        %1401 = vmatpush1.msra.mxu0 %v1328
        %1402 = vmatprep.subr.mxu0 %v1331
        %1403 = vmatpush1.msra.mxu0 %v1330
        %1404 = vmatprep.subr.mxu0 %v1333
        %1405 = vmatpush1.msra.mxu0 %v1332
        %1406 = vmatprep.subr.mxu0 %v1335
        %1407 = vmatpush1.msra.mxu0 %v1334
        %1408 = vmatprep.subr.mxu0 %v1337
        %1409 = vmatpush1.msra.mxu0 %v1336
        %1410 = vmatprep.subr.mxu0 %v1339
        %1411 = vmatpush1.msra.mxu0 %v1338
        %1412 = vmatprep.mubr.f32.mxu0 %v1167
        %1413 = vmatmul.mubr.f32.gmra.mrb[0].mxu0 %v1165
        %v1414 = vpop.f32.mrb[0].mxu0
        %v1415 = vadd.f32 %v1343, %v1414
        %v1416 = vpop.f32.mrb[0].mxu0
        %v1417 = vadd.f32 %v1347, %v1416
        %1418 = vmatprep.mubr.f32.mxu0 %v1173
        %1419 = vmatmul.mubr.f32.gmra.mrb[0].mxu0 %v1171
        %v1420 = vpop.f32.mrb[0].mxu0
        %v1421 = vadd.f32 %v1343, %v1420
        %v1422 = vpop.f32.mrb[0].mxu0
        %v1423 = vadd.f32 %v1347, %v1422
        %1424 = vdwg.mxu0
        %1425 = vmatprep.subr.mxu0 %v1417
        %1426 = vmatpush1.msra.mxu0 %v1415
        %1427 = vmatprep.subr.mxu0 %v1423
        %1428 = vmatpush1.msra.mxu0 %v1421
        %1429 = vmatprep.subr.mxu0 0.0
        %1430 = vmatpush1.msra.mxu0 0.0
        %1431 = vmatprep.subr.mxu0 0.0
        %1432 = vmatpush1.msra.mxu0 0.0
        %1433 = vmatprep.subr.mxu0 0.0
        %1434 = vmatpush1.msra.mxu0 0.0
        %1435 = vmatprep.subr.mxu0 0.0
        %1436 = vmatpush1.msra.mxu0 0.0
        %1437 = vmatprep.subr.mxu0 0.0
        %1438 = vmatpush1.msra.mxu0 0.0
        %1439 = vmatprep.subr.mxu0 0.0
        %1440 = vmatpush1.msra.mxu0 0.0
        %1441 = vmatprep.subr.mxu0 0.0
        %1442 = vmatpush1.msra.mxu0 0.0
        %1443 = vmatprep.subr.mxu0 0.0
        %1444 = vmatpush1.msra.mxu0 0.0
        %1445 = vmatprep.subr.mxu0 0.0
        %1446 = vmatpush1.msra.mxu0 0.0
        %1447 = vmatprep.subr.mxu0 0.0
        %1448 = vmatpush1.msra.mxu0 0.0
        %1449 = vmatprep.subr.mxu0 0.0
        %1450 = vmatpush1.msra.mxu0 0.0
        %1451 = vmatprep.subr.mxu0 0.0
        %1452 = vmatpush1.msra.mxu0 0.0
        %1453 = vmatprep.subr.mxu0 0.0
        %1454 = vmatpush1.msra.mxu0 0.0
        %1455 = vmatprep.subr.mxu0 0.0
        %1456 = vmatpush1.msra.mxu0 0.0
        %1457 = vmatprep.subr.mxu0 0.0
        %1458 = vmatpush1.msra.mxu0 0.0
        %1459 = vmatprep.subr.mxu0 0.0
        %1460 = vmatpush1.msra.mxu0 0.0
        %1461 = vmatprep.subr.mxu0 0.0
        %1462 = vmatpush1.msra.mxu0 0.0
        %1463 = vmatprep.subr.mxu0 0.0
        %1464 = vmatpush1.msra.mxu0 0.0
        %1465 = vmatprep.subr.mxu0 0.0
        %1466 = vmatpush1.msra.mxu0 0.0
        %1467 = vmatprep.subr.mxu0 0.0
        %1468 = vmatpush1.msra.mxu0 0.0
        %1469 = vmatprep.subr.mxu0 0.0
        %1470 = vmatpush1.msra.mxu0 0.0
        %1471 = vmatprep.subr.mxu0 0.0
        %1472 = vmatpush1.msra.mxu0 0.0
        %1473 = vmatprep.subr.mxu0 0.0
        %1474 = vmatpush1.msra.mxu0 0.0
        %1475 = vmatprep.subr.mxu0 0.0
        %1476 = vmatpush1.msra.mxu0 0.0
        %1477 = vmatprep.subr.mxu0 0.0
        %1478 = vmatpush1.msra.mxu0 0.0
        %1479 = vmatprep.subr.mxu0 0.0
        %1480 = vmatpush1.msra.mxu0 0.0
        %1481 = vmatprep.subr.mxu0 0.0
        %1482 = vmatpush1.msra.mxu0 0.0
        %1483 = vmatprep.subr.mxu0 0.0
        %1484 = vmatpush1.msra.mxu0 0.0
        %1485 = vmatprep.subr.mxu0 0.0
        %1486 = vmatpush1.msra.mxu0 0.0
        %1487 = vmatprep.subr.mxu0 0.0
        %1488 = vmatpush1.msra.mxu0 0.0
        %1489 = vmatprep.mubr.f32.mxu0 0.0
        %1490 = vmatmul.mubr.f32.gmra.mrb[0].mxu0 %v637
        %v1491 = vpop.f32.mrb[0].mxu0
        %v1492 = vadd.f32 0.0, %v1491
        %v1493 = vpop.f32.mrb[0].mxu0
        %v1494 = vadd.f32 0.0, %v1493
        %1495 = vmatprep.mubr.f32.mxu0 0.0
        %1496 = vmatmul.mubr.f32.gmra.mrb[0].mxu0 %v640
        %v1497 = vpop.f32.mrb[0].mxu0
        %v1498 = vadd.f32 0.0, %v1497
        %v1499 = vpop.f32.mrb[0].mxu0
        %v1500 = vadd.f32 0.0, %v1499
        %1501 = vdwg.mxu0
        %v1502 = vlaneseq
        %v1503 = vshrl.u32 %v1502, 7
        %v1504 = vsub.s32 0, %v1503
        %v1505 = vrot.slane %v525, %v1504
        %v1506 = vlaneseq
        %v1507 = vshrl.u32 %v1506, 7
        %v1508 = vsub.s32 0, %v1507
        %v1509 = vrot.slane %v526, %v1508
        %v1510 = vmul.f32 %v1492, %v1505
        %v1511 = vmul.f32 %v1494, %v1509
        %v1512 = vmul.f32 %v1498, %v1505
        %v1513 = vmul.f32 %v1500, %v1509
        %v1514 = vlaneseq
        %v1515 = vshrl.u32 %v1514, 7
        %v1516 = vsub.s32 1, %v1515
        %v1517 = vrot.slane %v525, %v1516
        %v1518 = vlaneseq
        %v1519 = vshrl.u32 %v1518, 7
        %v1520 = vsub.s32 1, %v1519
        %v1521 = vrot.slane %v526, %v1520
        %v1522 = vmul.f32 %v1415, %v1517
        %v1523 = vmul.f32 %v1417, %v1521
        %v1524 = vmul.f32 %v1421, %v1517
        %v1525 = vmul.f32 %v1423, %v1521
        %v1526 = vadd.f32 %v1510, %v1522
        %v1527 = vadd.f32 %v1511, %v1523
        %v1528 = vadd.f32 %v1512, %v1524
        %v1529 = vadd.f32 %v1513, %v1525
        %1530 = vmatprep.subr.mxu0 %v1417
        %1531 = vmatpush1.msra.mxu0 %v1415
        %1532 = vmatprep.subr.mxu0 %v1423
        %1533 = vmatpush1.msra.mxu0 %v1421
        %1534 = vmatprep.subr.mxu0 0.0
        %1535 = vmatpush1.msra.mxu0 0.0
        %1536 = vmatprep.subr.mxu0 0.0
        %1537 = vmatpush1.msra.mxu0 0.0
        %1538 = vmatprep.subr.mxu0 0.0
        %1539 = vmatpush1.msra.mxu0 0.0
        %1540 = vmatprep.subr.mxu0 0.0
        %1541 = vmatpush1.msra.mxu0 0.0
        %1542 = vmatprep.subr.mxu0 0.0
        %1543 = vmatpush1.msra.mxu0 0.0
        %1544 = vmatprep.subr.mxu0 0.0
        %1545 = vmatpush1.msra.mxu0 0.0
        %1546 = vmatprep.subr.mxu0 0.0
        %1547 = vmatpush1.msra.mxu0 0.0
        %1548 = vmatprep.subr.mxu0 0.0
        %1549 = vmatpush1.msra.mxu0 0.0
        %1550 = vmatprep.subr.mxu0 0.0
        %1551 = vmatpush1.msra.mxu0 0.0
        %1552 = vmatprep.subr.mxu0 0.0
        %1553 = vmatpush1.msra.mxu0 0.0
        %1554 = vmatprep.subr.mxu0 0.0
        %1555 = vmatpush1.msra.mxu0 0.0
        %1556 = vmatprep.subr.mxu0 0.0
        %1557 = vmatpush1.msra.mxu0 0.0
        %1558 = vmatprep.subr.mxu0 0.0
        %1559 = vmatpush1.msra.mxu0 0.0
        %1560 = vmatprep.subr.mxu0 0.0
        %1561 = vmatpush1.msra.mxu0 0.0
        %1562 = vmatprep.subr.mxu0 0.0
        %1563 = vmatpush1.msra.mxu0 0.0
        %1564 = vmatprep.subr.mxu0 0.0
        %1565 = vmatpush1.msra.mxu0 0.0
        %1566 = vmatprep.subr.mxu0 0.0
        %1567 = vmatpush1.msra.mxu0 0.0
        %1568 = vmatprep.subr.mxu0 0.0
        %1569 = vmatpush1.msra.mxu0 0.0
        %1570 = vmatprep.subr.mxu0 0.0
        %1571 = vmatpush1.msra.mxu0 0.0
        %1572 = vmatprep.subr.mxu0 0.0
        %1573 = vmatpush1.msra.mxu0 0.0
        %1574 = vmatprep.subr.mxu0 0.0
        %1575 = vmatpush1.msra.mxu0 0.0
        %1576 = vmatprep.subr.mxu0 0.0
        %1577 = vmatpush1.msra.mxu0 0.0
        %1578 = vmatprep.subr.mxu0 0.0
        %1579 = vmatpush1.msra.mxu0 0.0
        %1580 = vmatprep.subr.mxu0 0.0
        %1581 = vmatpush1.msra.mxu0 0.0
        %1582 = vmatprep.subr.mxu0 0.0
        %1583 = vmatpush1.msra.mxu0 0.0
        %1584 = vmatprep.subr.mxu0 0.0
        %1585 = vmatpush1.msra.mxu0 0.0
        %1586 = vmatprep.subr.mxu0 0.0
        %1587 = vmatpush1.msra.mxu0 0.0
        %1588 = vmatprep.subr.mxu0 0.0
        %1589 = vmatpush1.msra.mxu0 0.0
        %1590 = vmatprep.subr.mxu0 0.0
        %1591 = vmatpush1.msra.mxu0 0.0
        %1592 = vmatprep.subr.mxu0 0.0
        %1593 = vmatpush1.msra.mxu0 0.0
        %1594 = vmatprep.mubr.f32.mxu0 0.0
        %1595 = vmatmul.mubr.f32.gmra.mrb[0].mxu0 %v888
        %v1596 = vpop.f32.mrb[0].mxu0
        %v1597 = vadd.f32 0.0, %v1596
        %v1598 = vpop.f32.mrb[0].mxu0
        %v1599 = vadd.f32 0.0, %v1598
        %1600 = vmatprep.mubr.f32.mxu0 0.0
        %1601 = vmatmul.mubr.f32.gmra.mrb[0].mxu0 %v891
        %v1602 = vpop.f32.mrb[0].mxu0
        %v1603 = vadd.f32 0.0, %v1602
        %v1604 = vpop.f32.mrb[0].mxu0
        %v1605 = vadd.f32 0.0, %v1604
        %1606 = vdwg.mxu0
        %v1607 = vlaneseq
        %v1608 = vshrl.u32 %v1607, 7
        %v1609 = vsub.s32 2, %v1608
        %v1610 = vrot.slane %v525, %v1609
        %v1611 = vlaneseq
        %v1612 = vshrl.u32 %v1611, 7
        %v1613 = vsub.s32 2, %v1612
        %v1614 = vrot.slane %v526, %v1613
        %v1615 = vmul.f32 %v1597, %v1610
        %v1616 = vmul.f32 %v1599, %v1614
        %v1617 = vmul.f32 %v1603, %v1610
        %v1618 = vmul.f32 %v1605, %v1614
        %v1619 = vadd.f32 %v1526, %v1615
        %v1620 = vadd.f32 %v1527, %v1616
        %v1621 = vadd.f32 %v1528, %v1617
        %v1622 = vadd.f32 %v1529, %v1618
        %v1623 = vlaneseq
        %v1624 = vshrl.u32 %v1623, 7
        %v1625 = vsub.s32 3, %v1624
        %v1626 = vrot.slane %v528, %v1625
        %v1627 = vlaneseq
        %v1628 = vshrl.u32 %v1627, 7
        %v1629 = vsub.s32 3, %v1628
        %v1630 = vrot.slane %v529, %v1629
        %v1631 = vadd.f32 %v1619, %v1626
        %v1632 = vadd.f32 %v1620, %v1630
        %v1633 = vadd.f32 %v1621, %v1626
        %v1634 = vadd.f32 %v1622, %v1630
        %v1635 = vld [vmem:[#allocation7] sm:$0xff]
        %v1636 = vld [vmem:[#allocation7 + $0x8] sm:$0xff]
        %v1637 = vld [vmem:[#allocation7 + $0x10] sm:$0xff]
        %v1638 = vld [vmem:[#allocation7 + $0x18] sm:$0xff]
        %v1639 = vld [vmem:[#allocation7 + $0x20] sm:$0xff]
        %v1640 = vld [vmem:[#allocation7 + $0x28] sm:$0xff]
        %v1641 = vld [vmem:[#allocation7 + $0x30] sm:$0xff]
        %v1642 = vld [vmem:[#allocation7 + $0x38] sm:$0xff]
        %v1643 = vld [vmem:[#allocation7 + $0x40] sm:$0xff]
        %v1644 = vld [vmem:[#allocation7 + $0x48] sm:$0xff]
        %v1645 = vld [vmem:[#allocation7 + $0x50] sm:$0xff]
        %v1646 = vld [vmem:[#allocation7 + $0x58] sm:$0xff]
        %v1647 = vld [vmem:[#allocation7 + $0x60] sm:$0xff]
        %v1648 = vld [vmem:[#allocation7 + $0x68] sm:$0xff]
        %v1649 = vld [vmem:[#allocation7 + $0x70] sm:$0xff]
        %v1650 = vld [vmem:[#allocation7 + $0x78] sm:$0xff]
        %v1651 = vld [vmem:[#allocation7 + $0x80] sm:$0xff]
        %v1652 = vld [vmem:[#allocation7 + $0x88] sm:$0xff]
        %v1653 = vld [vmem:[#allocation7 + $0x90] sm:$0xff]
        %v1654 = vld [vmem:[#allocation7 + $0x98] sm:$0xff]
        %v1655 = vld [vmem:[#allocation7 + $0xa0] sm:$0xff]
        %v1656 = vld [vmem:[#allocation7 + $0xa8] sm:$0xff]
        %v1657 = vld [vmem:[#allocation7 + $0xb0] sm:$0xff]
        %v1658 = vld [vmem:[#allocation7 + $0xb8] sm:$0xff]
        %v1659 = vld [vmem:[#allocation7 + $0xc0] sm:$0xff]
        %v1660 = vld [vmem:[#allocation7 + $0xc8] sm:$0xff]
        %v1661 = vld [vmem:[#allocation7 + $0xd0] sm:$0xff]
        %v1662 = vld [vmem:[#allocation7 + $0xd8] sm:$0xff]
        %v1663 = vld [vmem:[#allocation7 + $0xe0] sm:$0xff]
        %v1664 = vld [vmem:[#allocation7 + $0xe8] sm:$0xff]
        %v1665 = vld [vmem:[#allocation7 + $0xf0] sm:$0xff]
        %v1666 = vld [vmem:[#allocation7 + $0xf8] sm:$0xff]
        %v1667 = vld [vmem:[#allocation7 + $0x100] sm:$0xff]
        %v1668 = vld [vmem:[#allocation7 + $0x108] sm:$0xff]
        %v1669 = vld [vmem:[#allocation7 + $0x110] sm:$0xff]
        %v1670 = vld [vmem:[#allocation7 + $0x118] sm:$0xff]
        %v1671 = vld [vmem:[#allocation7 + $0x120] sm:$0xff]
        %v1672 = vld [vmem:[#allocation7 + $0x128] sm:$0xff]
        %v1673 = vld [vmem:[#allocation7 + $0x130] sm:$0xff]
        %v1674 = vld [vmem:[#allocation7 + $0x138] sm:$0xff]
        %v1675 = vld [vmem:[#allocation7 + $0x140] sm:$0xff]
        %v1676 = vld [vmem:[#allocation7 + $0x148] sm:$0xff]
        %v1677 = vld [vmem:[#allocation7 + $0x150] sm:$0xff]
        %v1678 = vld [vmem:[#allocation7 + $0x158] sm:$0xff]
        %v1679 = vld [vmem:[#allocation7 + $0x160] sm:$0xff]
        %v1680 = vld [vmem:[#allocation7 + $0x168] sm:$0xff]
        %v1681 = vld [vmem:[#allocation7 + $0x170] sm:$0xff]
        %v1682 = vld [vmem:[#allocation7 + $0x178] sm:$0xff]
        %v1683 = vld [vmem:[#allocation7 + $0x180] sm:$0xff]
        %v1684 = vld [vmem:[#allocation7 + $0x188] sm:$0xff]
        %v1685 = vld [vmem:[#allocation7 + $0x190] sm:$0xff]
        %v1686 = vld [vmem:[#allocation7 + $0x198] sm:$0xff]
        %v1687 = vld [vmem:[#allocation7 + $0x1a0] sm:$0xff]
        %v1688 = vld [vmem:[#allocation7 + $0x1a8] sm:$0xff]
        %v1689 = vld [vmem:[#allocation7 + $0x1b0] sm:$0xff]
        %v1690 = vld [vmem:[#allocation7 + $0x1b8] sm:$0xff]
        %v1691 = vld [vmem:[#allocation7 + $0x1c0] sm:$0xff]
        %v1692 = vld [vmem:[#allocation7 + $0x1c8] sm:$0xff]
        %v1693 = vld [vmem:[#allocation7 + $0x1d0] sm:$0xff]
        %v1694 = vld [vmem:[#allocation7 + $0x1d8] sm:$0xff]
        %v1695 = vld [vmem:[#allocation7 + $0x1e0] sm:$0xff]
        %v1696 = vld [vmem:[#allocation7 + $0x1e8] sm:$0xff]
        %v1697 = vld [vmem:[#allocation7 + $0x1f0] sm:$0xff]
        %v1698 = vld [vmem:[#allocation7 + $0x1f8] sm:$0xff]
        %v1699 = vlaneseq
        %v1700 = vshrl.u32 %v1699, 7
        %v1701 = vsub.s32 4, %v1700
        %v1702 = vrot.slane %v528, %v1701
        %v1703 = vlaneseq
        %v1704 = vshrl.u32 %v1703, 7
        %v1705 = vsub.s32 4, %v1704
        %v1706 = vrot.slane %v529, %v1705
        %1707 = vmatprep.subr.mxu0 %v1636
        %1708 = vmatpush1.msra.mxu0 %v1635
        %1709 = vmatprep.subr.mxu0 %v1638
        %1710 = vmatpush1.msra.mxu0 %v1637
        %1711 = vmatprep.subr.mxu0 %v1640
        %1712 = vmatpush1.msra.mxu0 %v1639
        %1713 = vmatprep.subr.mxu0 %v1642
        %1714 = vmatpush1.msra.mxu0 %v1641
        %1715 = vmatprep.subr.mxu0 %v1644
        %1716 = vmatpush1.msra.mxu0 %v1643
        %1717 = vmatprep.subr.mxu0 %v1646
        %1718 = vmatpush1.msra.mxu0 %v1645
        %1719 = vmatprep.subr.mxu0 %v1648
        %1720 = vmatpush1.msra.mxu0 %v1647
        %1721 = vmatprep.subr.mxu0 %v1650
        %1722 = vmatpush1.msra.mxu0 %v1649
        %1723 = vmatprep.subr.mxu0 %v1652
        %1724 = vmatpush1.msra.mxu0 %v1651
        %1725 = vmatprep.subr.mxu0 %v1654
        %1726 = vmatpush1.msra.mxu0 %v1653
        %1727 = vmatprep.subr.mxu0 %v1656
        %1728 = vmatpush1.msra.mxu0 %v1655
        %1729 = vmatprep.subr.mxu0 %v1658
        %1730 = vmatpush1.msra.mxu0 %v1657
        %1731 = vmatprep.subr.mxu0 %v1660
        %1732 = vmatpush1.msra.mxu0 %v1659
        %1733 = vmatprep.subr.mxu0 %v1662
        %1734 = vmatpush1.msra.mxu0 %v1661
        %1735 = vmatprep.subr.mxu0 %v1664
        %1736 = vmatpush1.msra.mxu0 %v1663
        %1737 = vmatprep.subr.mxu0 %v1666
        %1738 = vmatpush1.msra.mxu0 %v1665
        %1739 = vmatprep.subr.mxu0 %v1668
        %1740 = vmatpush1.msra.mxu0 %v1667
        %1741 = vmatprep.subr.mxu0 %v1670
        %1742 = vmatpush1.msra.mxu0 %v1669
        %1743 = vmatprep.subr.mxu0 %v1672
        %1744 = vmatpush1.msra.mxu0 %v1671
        %1745 = vmatprep.subr.mxu0 %v1674
        %1746 = vmatpush1.msra.mxu0 %v1673
        %1747 = vmatprep.subr.mxu0 %v1676
        %1748 = vmatpush1.msra.mxu0 %v1675
        %1749 = vmatprep.subr.mxu0 %v1678
        %1750 = vmatpush1.msra.mxu0 %v1677
        %1751 = vmatprep.subr.mxu0 %v1680
        %1752 = vmatpush1.msra.mxu0 %v1679
        %1753 = vmatprep.subr.mxu0 %v1682
        %1754 = vmatpush1.msra.mxu0 %v1681
        %1755 = vmatprep.subr.mxu0 %v1684
        %1756 = vmatpush1.msra.mxu0 %v1683
        %1757 = vmatprep.subr.mxu0 %v1686
        %1758 = vmatpush1.msra.mxu0 %v1685
        %1759 = vmatprep.subr.mxu0 %v1688
        %1760 = vmatpush1.msra.mxu0 %v1687
        %1761 = vmatprep.subr.mxu0 %v1690
        %1762 = vmatpush1.msra.mxu0 %v1689
        %1763 = vmatprep.subr.mxu0 %v1692
        %1764 = vmatpush1.msra.mxu0 %v1691
        %1765 = vmatprep.subr.mxu0 %v1694
        %1766 = vmatpush1.msra.mxu0 %v1693
        %1767 = vmatprep.subr.mxu0 %v1696
        %1768 = vmatpush1.msra.mxu0 %v1695
        %1769 = vmatprep.subr.mxu0 %v1698
        %1770 = vmatpush1.msra.mxu0 %v1697
        %1771 = vmatprep.mubr.f32.mxu0 %v1632
        %1772 = vmatmul.mubr.f32.gmra.mrb[0].mxu0 %v1631
        %v1773 = vpop.f32.mrb[0].mxu0
        %v1774 = vadd.f32 %v1702, %v1773
        %v1775 = vpop.f32.mrb[0].mxu0
        %v1776 = vadd.f32 %v1706, %v1775
        %1777 = vmatprep.mubr.f32.mxu0 %v1634
        %1778 = vmatmul.mubr.f32.gmra.mrb[0].mxu0 %v1633
        %v1779 = vpop.f32.mrb[0].mxu0
        %v1780 = vadd.f32 %v1702, %v1779
        %v1781 = vpop.f32.mrb[0].mxu0
        %v1782 = vadd.f32 %v1706, %v1781
        %1783 = vdwg.mxu0
        %v1785 = vsel %vm635, %v520, 0
        %v1788 = vsel %vm635, %v521, 0
        %1790 = vmatprep.subr.mxu0 %v1776
        %1791 = vmatpush1.msra.mxu0 %v1774
        %1792 = vmatprep.subr.mxu0 %v1782
        %1793 = vmatpush1.msra.mxu0 %v1780
        %1794 = vmatprep.subr.mxu0 0.0
        %1795 = vmatpush1.msra.mxu0 0.0
        %1796 = vmatprep.subr.mxu0 0.0
        %1797 = vmatpush1.msra.mxu0 0.0
        %1798 = vmatprep.subr.mxu0 0.0
        %1799 = vmatpush1.msra.mxu0 0.0
        %1800 = vmatprep.subr.mxu0 0.0
        %1801 = vmatpush1.msra.mxu0 0.0
        %1802 = vmatprep.subr.mxu0 0.0
        %1803 = vmatpush1.msra.mxu0 0.0
        %1804 = vmatprep.subr.mxu0 0.0
        %1805 = vmatpush1.msra.mxu0 0.0
        %1806 = vmatprep.subr.mxu0 0.0
        %1807 = vmatpush1.msra.mxu0 0.0
        %1808 = vmatprep.subr.mxu0 0.0
        %1809 = vmatpush1.msra.mxu0 0.0
        %1810 = vmatprep.subr.mxu0 0.0
        %1811 = vmatpush1.msra.mxu0 0.0
        %1812 = vmatprep.subr.mxu0 0.0
        %1813 = vmatpush1.msra.mxu0 0.0
        %1814 = vmatprep.subr.mxu0 0.0
        %1815 = vmatpush1.msra.mxu0 0.0
        %1816 = vmatprep.subr.mxu0 0.0
        %1817 = vmatpush1.msra.mxu0 0.0
        %1818 = vmatprep.subr.mxu0 0.0
        %1819 = vmatpush1.msra.mxu0 0.0
        %1820 = vmatprep.subr.mxu0 0.0
        %1821 = vmatpush1.msra.mxu0 0.0
        %1822 = vmatprep.subr.mxu0 0.0
        %1823 = vmatpush1.msra.mxu0 0.0
        %1824 = vmatprep.subr.mxu0 0.0
        %1825 = vmatpush1.msra.mxu0 0.0
        %1826 = vmatprep.subr.mxu0 0.0
        %1827 = vmatpush1.msra.mxu0 0.0
        %1828 = vmatprep.subr.mxu0 0.0
        %1829 = vmatpush1.msra.mxu0 0.0
        %1830 = vmatprep.subr.mxu0 0.0
        %1831 = vmatpush1.msra.mxu0 0.0
        %1832 = vmatprep.subr.mxu0 0.0
        %1833 = vmatpush1.msra.mxu0 0.0
        %1834 = vmatprep.subr.mxu0 0.0
        %1835 = vmatpush1.msra.mxu0 0.0
        %1836 = vmatprep.subr.mxu0 0.0
        %1837 = vmatpush1.msra.mxu0 0.0
        %1838 = vmatprep.subr.mxu0 0.0
        %1839 = vmatpush1.msra.mxu0 0.0
        %1840 = vmatprep.subr.mxu0 0.0
        %1841 = vmatpush1.msra.mxu0 0.0
        %1842 = vmatprep.subr.mxu0 0.0
        %1843 = vmatpush1.msra.mxu0 0.0
        %1844 = vmatprep.subr.mxu0 0.0
        %1845 = vmatpush1.msra.mxu0 0.0
        %1846 = vmatprep.subr.mxu0 0.0
        %1847 = vmatpush1.msra.mxu0 0.0
        %1848 = vmatprep.subr.mxu0 0.0
        %1849 = vmatpush1.msra.mxu0 0.0
        %1850 = vmatprep.subr.mxu0 0.0
        %1851 = vmatpush1.msra.mxu0 0.0
        %1852 = vmatprep.subr.mxu0 0.0
        %1853 = vmatpush1.msra.mxu0 0.0
        %1854 = vmatprep.mubr.f32.mxu0 0.0
        %1855 = vmatmul.mubr.f32.gmra.mrb[0].mxu0 %v1785
        %v1856 = vpop.f32.mrb[0].mxu0
        %v1857 = vadd.f32 0.0, %v1856
        %v1858 = vpop.f32.mrb[0].mxu0
        %v1859 = vadd.f32 0.0, %v1858
        %1860 = vmatprep.mubr.f32.mxu0 0.0
        %1861 = vmatmul.mubr.f32.gmra.mrb[0].mxu0 %v1788
        %v1862 = vpop.f32.mrb[0].mxu0
        %v1863 = vadd.f32 0.0, %v1862
        %v1864 = vpop.f32.mrb[0].mxu0
        %v1865 = vadd.f32 0.0, %v1864
        %1866 = vdwg.mxu0
        %v1867 = vlaneseq
        %v1868 = vshrl.u32 %v1867, 7
        %v1869 = vsub.s32 3, %v1868
        %v1870 = vrot.slane %v525, %v1869
        %v1871 = vlaneseq
        %v1872 = vshrl.u32 %v1871, 7
        %v1873 = vsub.s32 3, %v1872
        %v1874 = vrot.slane %v526, %v1873
        %v1875 = vmul.f32 %v1857, %v1870
        %v1876 = vmul.f32 %v1859, %v1874
        %v1877 = vmul.f32 %v1863, %v1870
        %v1878 = vmul.f32 %v1865, %v1874
        %v1879 = vlaneseq
        %v1880 = vshrl.u32 %v1879, 7
        %v1881 = vsub.s32 4, %v1880
        %v1882 = vrot.slane %v525, %v1881
        %v1883 = vlaneseq
        %v1884 = vshrl.u32 %v1883, 7
        %v1885 = vsub.s32 4, %v1884
        %v1886 = vrot.slane %v526, %v1885
        %v1887 = vmul.f32 %v1774, %v1882
        %v1888 = vmul.f32 %v1776, %v1886
        %v1889 = vmul.f32 %v1780, %v1882
        %v1890 = vmul.f32 %v1782, %v1886
        %v1891 = vadd.f32 %v1875, %v1887
        %v1892 = vadd.f32 %v1876, %v1888
        %v1893 = vadd.f32 %v1877, %v1889
        %v1894 = vadd.f32 %v1878, %v1890
        %v1896 = vsel %vm635, %v523, 0
        %v1899 = vsel %vm635, %v524, 0
        %1901 = vmatprep.subr.mxu0 %v1776
        %1902 = vmatpush1.msra.mxu0 %v1774
        %1903 = vmatprep.subr.mxu0 %v1782
        %1904 = vmatpush1.msra.mxu0 %v1780
        %1905 = vmatprep.subr.mxu0 0.0
        %1906 = vmatpush1.msra.mxu0 0.0
        %1907 = vmatprep.subr.mxu0 0.0
        %1908 = vmatpush1.msra.mxu0 0.0
        %1909 = vmatprep.subr.mxu0 0.0
        %1910 = vmatpush1.msra.mxu0 0.0
        %1911 = vmatprep.subr.mxu0 0.0
        %1912 = vmatpush1.msra.mxu0 0.0
        %1913 = vmatprep.subr.mxu0 0.0
        %1914 = vmatpush1.msra.mxu0 0.0
        %1915 = vmatprep.subr.mxu0 0.0
        %1916 = vmatpush1.msra.mxu0 0.0
        %1917 = vmatprep.subr.mxu0 0.0
        %1918 = vmatpush1.msra.mxu0 0.0
        %1919 = vmatprep.subr.mxu0 0.0
        %1920 = vmatpush1.msra.mxu0 0.0
        %1921 = vmatprep.subr.mxu0 0.0
        %1922 = vmatpush1.msra.mxu0 0.0
        %1923 = vmatprep.subr.mxu0 0.0
        %1924 = vmatpush1.msra.mxu0 0.0
        %1925 = vmatprep.subr.mxu0 0.0
        %1926 = vmatpush1.msra.mxu0 0.0
        %1927 = vmatprep.subr.mxu0 0.0
        %1928 = vmatpush1.msra.mxu0 0.0
        %1929 = vmatprep.subr.mxu0 0.0
        %1930 = vmatpush1.msra.mxu0 0.0
        %1931 = vmatprep.subr.mxu0 0.0
        %1932 = vmatpush1.msra.mxu0 0.0
        %1933 = vmatprep.subr.mxu0 0.0
        %1934 = vmatpush1.msra.mxu0 0.0
        %1935 = vmatprep.subr.mxu0 0.0
        %1936 = vmatpush1.msra.mxu0 0.0
        %1937 = vmatprep.subr.mxu0 0.0
        %1938 = vmatpush1.msra.mxu0 0.0
        %1939 = vmatprep.subr.mxu0 0.0
        %1940 = vmatpush1.msra.mxu0 0.0
        %1941 = vmatprep.subr.mxu0 0.0
        %1942 = vmatpush1.msra.mxu0 0.0
        %1943 = vmatprep.subr.mxu0 0.0
        %1944 = vmatpush1.msra.mxu0 0.0
        %1945 = vmatprep.subr.mxu0 0.0
        %1946 = vmatpush1.msra.mxu0 0.0
        %1947 = vmatprep.subr.mxu0 0.0
        %1948 = vmatpush1.msra.mxu0 0.0
        %1949 = vmatprep.subr.mxu0 0.0
        %1950 = vmatpush1.msra.mxu0 0.0
        %1951 = vmatprep.subr.mxu0 0.0
        %1952 = vmatpush1.msra.mxu0 0.0
        %1953 = vmatprep.subr.mxu0 0.0
        %1954 = vmatpush1.msra.mxu0 0.0
        %1955 = vmatprep.subr.mxu0 0.0
        %1956 = vmatpush1.msra.mxu0 0.0
        %1957 = vmatprep.subr.mxu0 0.0
        %1958 = vmatpush1.msra.mxu0 0.0
        %1959 = vmatprep.subr.mxu0 0.0
        %1960 = vmatpush1.msra.mxu0 0.0
        %1961 = vmatprep.subr.mxu0 0.0
        %1962 = vmatpush1.msra.mxu0 0.0
        %1963 = vmatprep.subr.mxu0 0.0
        %1964 = vmatpush1.msra.mxu0 0.0
        %1965 = vmatprep.mubr.f32.mxu0 0.0
        %1966 = vmatmul.mubr.f32.gmra.mrb[0].mxu0 %v1896
        %v1967 = vpop.f32.mrb[0].mxu0
        %v1968 = vadd.f32 0.0, %v1967
        %v1969 = vpop.f32.mrb[0].mxu0
        %v1970 = vadd.f32 0.0, %v1969
        %1971 = vmatprep.mubr.f32.mxu0 0.0
        %1972 = vmatmul.mubr.f32.gmra.mrb[0].mxu0 %v1899
        %v1973 = vpop.f32.mrb[0].mxu0
        %v1974 = vadd.f32 0.0, %v1973
        %v1975 = vpop.f32.mrb[0].mxu0
        %v1976 = vadd.f32 0.0, %v1975
        %1977 = vdwg.mxu0
        %v1978 = vlaneseq
        %v1979 = vshrl.u32 %v1978, 7
        %v1980 = vsub.s32 5, %v1979
        %v1981 = vrot.slane %v525, %v1980
        %v1982 = vlaneseq
        %v1983 = vshrl.u32 %v1982, 7
        %v1984 = vsub.s32 5, %v1983
        %v1985 = vrot.slane %v526, %v1984
        %v1986 = vmul.f32 %v1968, %v1981
        %v1987 = vmul.f32 %v1970, %v1985
        %v1988 = vmul.f32 %v1974, %v1981
        %v1989 = vmul.f32 %v1976, %v1985
        %v1990 = vadd.f32 %v1891, %v1986
        %v1991 = vadd.f32 %v1892, %v1987
        %v1992 = vadd.f32 %v1893, %v1988
        %v1993 = vadd.f32 %v1894, %v1989
        %v1994 = vlaneseq
        %v1995 = vshrl.u32 %v1994, 7
        %v1996 = vsub.s32 5, %v1995
        %v1997 = vrot.slane %v528, %v1996
        %v1998 = vlaneseq
        %v1999 = vshrl.u32 %v1998, 7
        %v2000 = vsub.s32 5, %v1999
        %v2001 = vrot.slane %v529, %v2000
        %v2002 = vadd.f32 %v1990, %v1997
        %v2003 = vadd.f32 %v1991, %v2001
        %v2004 = vadd.f32 %v1992, %v1997
        %v2005 = vadd.f32 %v1993, %v2001
        %v2006 = vld [vmem:[#allocation9] sm:$0xff]
        %v2007 = vld [vmem:[#allocation9 + $0x8] sm:$0xff]
        %v2008 = vld [vmem:[#allocation9 + $0x10] sm:$0xff]
        %v2009 = vld [vmem:[#allocation9 + $0x18] sm:$0xff]
        %v2010 = vld [vmem:[#allocation9 + $0x20] sm:$0xff]
        %v2011 = vld [vmem:[#allocation9 + $0x28] sm:$0xff]
        %v2012 = vld [vmem:[#allocation9 + $0x30] sm:$0xff]
        %v2013 = vld [vmem:[#allocation9 + $0x38] sm:$0xff]
        %v2014 = vld [vmem:[#allocation9 + $0x40] sm:$0xff]
        %v2015 = vld [vmem:[#allocation9 + $0x48] sm:$0xff]
        %v2016 = vld [vmem:[#allocation9 + $0x50] sm:$0xff]
        %v2017 = vld [vmem:[#allocation9 + $0x58] sm:$0xff]
        %v2018 = vld [vmem:[#allocation9 + $0x60] sm:$0xff]
        %v2019 = vld [vmem:[#allocation9 + $0x68] sm:$0xff]
        %v2020 = vld [vmem:[#allocation9 + $0x70] sm:$0xff]
        %v2021 = vld [vmem:[#allocation9 + $0x78] sm:$0xff]
        %v2022 = vld [vmem:[#allocation9 + $0x80] sm:$0xff]
        %v2023 = vld [vmem:[#allocation9 + $0x88] sm:$0xff]
        %v2024 = vld [vmem:[#allocation9 + $0x90] sm:$0xff]
        %v2025 = vld [vmem:[#allocation9 + $0x98] sm:$0xff]
        %v2026 = vld [vmem:[#allocation9 + $0xa0] sm:$0xff]
        %v2027 = vld [vmem:[#allocation9 + $0xa8] sm:$0xff]
        %v2028 = vld [vmem:[#allocation9 + $0xb0] sm:$0xff]
        %v2029 = vld [vmem:[#allocation9 + $0xb8] sm:$0xff]
        %v2030 = vld [vmem:[#allocation9 + $0xc0] sm:$0xff]
        %v2031 = vld [vmem:[#allocation9 + $0xc8] sm:$0xff]
        %v2032 = vld [vmem:[#allocation9 + $0xd0] sm:$0xff]
        %v2033 = vld [vmem:[#allocation9 + $0xd8] sm:$0xff]
        %v2034 = vld [vmem:[#allocation9 + $0xe0] sm:$0xff]
        %v2035 = vld [vmem:[#allocation9 + $0xe8] sm:$0xff]
        %v2036 = vld [vmem:[#allocation9 + $0xf0] sm:$0xff]
        %v2037 = vld [vmem:[#allocation9 + $0xf8] sm:$0xff]
        %v2038 = vld [vmem:[#allocation9 + $0x100] sm:$0xff]
        %v2039 = vld [vmem:[#allocation9 + $0x108] sm:$0xff]
        %v2040 = vld [vmem:[#allocation9 + $0x110] sm:$0xff]
        %v2041 = vld [vmem:[#allocation9 + $0x118] sm:$0xff]
        %v2042 = vld [vmem:[#allocation9 + $0x120] sm:$0xff]
        %v2043 = vld [vmem:[#allocation9 + $0x128] sm:$0xff]
        %v2044 = vld [vmem:[#allocation9 + $0x130] sm:$0xff]
        %v2045 = vld [vmem:[#allocation9 + $0x138] sm:$0xff]
        %v2046 = vld [vmem:[#allocation9 + $0x140] sm:$0xff]
        %v2047 = vld [vmem:[#allocation9 + $0x148] sm:$0xff]
        %v2048 = vld [vmem:[#allocation9 + $0x150] sm:$0xff]
        %v2049 = vld [vmem:[#allocation9 + $0x158] sm:$0xff]
        %v2050 = vld [vmem:[#allocation9 + $0x160] sm:$0xff]
        %v2051 = vld [vmem:[#allocation9 + $0x168] sm:$0xff]
        %v2052 = vld [vmem:[#allocation9 + $0x170] sm:$0xff]
        %v2053 = vld [vmem:[#allocation9 + $0x178] sm:$0xff]
        %v2054 = vld [vmem:[#allocation9 + $0x180] sm:$0xff]
        %v2055 = vld [vmem:[#allocation9 + $0x188] sm:$0xff]
        %v2056 = vld [vmem:[#allocation9 + $0x190] sm:$0xff]
        %v2057 = vld [vmem:[#allocation9 + $0x198] sm:$0xff]
        %v2058 = vld [vmem:[#allocation9 + $0x1a0] sm:$0xff]
        %v2059 = vld [vmem:[#allocation9 + $0x1a8] sm:$0xff]
        %v2060 = vld [vmem:[#allocation9 + $0x1b0] sm:$0xff]
        %v2061 = vld [vmem:[#allocation9 + $0x1b8] sm:$0xff]
        %v2062 = vld [vmem:[#allocation9 + $0x1c0] sm:$0xff]
        %v2063 = vld [vmem:[#allocation9 + $0x1c8] sm:$0xff]
        %v2064 = vld [vmem:[#allocation9 + $0x1d0] sm:$0xff]
        %v2065 = vld [vmem:[#allocation9 + $0x1d8] sm:$0xff]
        %v2066 = vld [vmem:[#allocation9 + $0x1e0] sm:$0xff]
        %v2067 = vld [vmem:[#allocation9 + $0x1e8] sm:$0xff]
        %v2068 = vld [vmem:[#allocation9 + $0x1f0] sm:$0xff]
        %v2069 = vld [vmem:[#allocation9 + $0x1f8] sm:$0xff]
        %v2070 = vlaneseq
        %v2071 = vshrl.u32 %v2070, 7
        %v2072 = vsub.s32 6, %v2071
        %v2073 = vrot.slane %v528, %v2072
        %v2074 = vlaneseq
        %v2075 = vshrl.u32 %v2074, 7
        %v2076 = vsub.s32 6, %v2075
        %v2077 = vrot.slane %v529, %v2076
        %2078 = vmatprep.subr.mxu0 %v2007
        %2079 = vmatpush1.msra.mxu0 %v2006
        %2080 = vmatprep.subr.mxu0 %v2009
        %2081 = vmatpush1.msra.mxu0 %v2008
        %2082 = vmatprep.subr.mxu0 %v2011
        %2083 = vmatpush1.msra.mxu0 %v2010
        %2084 = vmatprep.subr.mxu0 %v2013
        %2085 = vmatpush1.msra.mxu0 %v2012
        %2086 = vmatprep.subr.mxu0 %v2015
        %2087 = vmatpush1.msra.mxu0 %v2014
        %2088 = vmatprep.subr.mxu0 %v2017
        %2089 = vmatpush1.msra.mxu0 %v2016
        %2090 = vmatprep.subr.mxu0 %v2019
        %2091 = vmatpush1.msra.mxu0 %v2018
        %2092 = vmatprep.subr.mxu0 %v2021
        %2093 = vmatpush1.msra.mxu0 %v2020
        %2094 = vmatprep.subr.mxu0 %v2023
        %2095 = vmatpush1.msra.mxu0 %v2022
        %2096 = vmatprep.subr.mxu0 %v2025
        %2097 = vmatpush1.msra.mxu0 %v2024
        %2098 = vmatprep.subr.mxu0 %v2027
        %2099 = vmatpush1.msra.mxu0 %v2026
        %2100 = vmatprep.subr.mxu0 %v2029
        %2101 = vmatpush1.msra.mxu0 %v2028
        %2102 = vmatprep.subr.mxu0 %v2031
        %2103 = vmatpush1.msra.mxu0 %v2030
        %2104 = vmatprep.subr.mxu0 %v2033
        %2105 = vmatpush1.msra.mxu0 %v2032
        %2106 = vmatprep.subr.mxu0 %v2035
        %2107 = vmatpush1.msra.mxu0 %v2034
        %2108 = vmatprep.subr.mxu0 %v2037
        %2109 = vmatpush1.msra.mxu0 %v2036
        %2110 = vmatprep.subr.mxu0 %v2039
        %2111 = vmatpush1.msra.mxu0 %v2038
        %2112 = vmatprep.subr.mxu0 %v2041
        %2113 = vmatpush1.msra.mxu0 %v2040
        %2114 = vmatprep.subr.mxu0 %v2043
        %2115 = vmatpush1.msra.mxu0 %v2042
        %2116 = vmatprep.subr.mxu0 %v2045
        %2117 = vmatpush1.msra.mxu0 %v2044
        %2118 = vmatprep.subr.mxu0 %v2047
        %2119 = vmatpush1.msra.mxu0 %v2046
        %2120 = vmatprep.subr.mxu0 %v2049
        %2121 = vmatpush1.msra.mxu0 %v2048
        %2122 = vmatprep.subr.mxu0 %v2051
        %2123 = vmatpush1.msra.mxu0 %v2050
        %2124 = vmatprep.subr.mxu0 %v2053
        %2125 = vmatpush1.msra.mxu0 %v2052
        %2126 = vmatprep.subr.mxu0 %v2055
        %2127 = vmatpush1.msra.mxu0 %v2054
        %2128 = vmatprep.subr.mxu0 %v2057
        %2129 = vmatpush1.msra.mxu0 %v2056
        %2130 = vmatprep.subr.mxu0 %v2059
        %2131 = vmatpush1.msra.mxu0 %v2058
        %2132 = vmatprep.subr.mxu0 %v2061
        %2133 = vmatpush1.msra.mxu0 %v2060
        %2134 = vmatprep.subr.mxu0 %v2063
        %2135 = vmatpush1.msra.mxu0 %v2062
        %2136 = vmatprep.subr.mxu0 %v2065
        %2137 = vmatpush1.msra.mxu0 %v2064
        %2138 = vmatprep.subr.mxu0 %v2067
        %2139 = vmatpush1.msra.mxu0 %v2066
        %2140 = vmatprep.subr.mxu0 %v2069
        %2141 = vmatpush1.msra.mxu0 %v2068
        %2142 = vmatprep.mubr.f32.mxu0 %v2003
        %2143 = vmatmul.mubr.f32.gmra.mrb[0].mxu0 %v2002
        %v2144 = vpop.f32.mrb[0].mxu0
        %v2145 = vadd.f32 %v2073, %v2144
        %v2146 = vpop.f32.mrb[0].mxu0
        %v2147 = vadd.f32 %v2077, %v2146
        %2148 = vmatprep.mubr.f32.mxu0 %v2005
        %2149 = vmatmul.mubr.f32.gmra.mrb[0].mxu0 %v2004
        %v2150 = vpop.f32.mrb[0].mxu0
        %v2151 = vadd.f32 %v2073, %v2150
        %v2152 = vpop.f32.mrb[0].mxu0
        %v2153 = vadd.f32 %v2077, %v2152
        %2154 = vdwg.mxu0
        %v2155 = vmul.f32 %v1165, %v2145
        %v2156 = vmul.f32 %v1167, %v2147
        %v2157 = vmul.f32 %v1171, %v2151
        %v2158 = vmul.f32 %v1173, %v2153
        %v2159 = vadd.f32 %v2155, %v1266
        %v2160 = vadd.f32 %v2156, %v1268
        %v2161 = vadd.f32 %v2157, %v1272
        %v2162 = vadd.f32 %v2158, %v1274
        %v2163 = vmax.f32 %v2159, 0.0
        %v2164 = vmax.f32 %v2160, 0.0
        %v2165 = vmax.f32 %v2161, 0.0
        %v2166 = vmax.f32 %v2162, 0.0
        %2167 = vst [vmem:[%s511] sm:$0xff] %v2163
        %2168 = vst [vmem:[%s511 + $0x8] sm:$0xff] %v2164
        %2169 = vst [vmem:[%s511 + $0x10] sm:$0xff] %v2165
        %2170 = vst [vmem:[%s511 + $0x18] sm:$0xff] %v2166
        %p2171 = scmp.lt.s32.totalorder %s27, 1
        %s2172 = scalar_select %p2171, %s27, 1
        %s2173 = smul.addr %s2172, 4
        %s2174 = smul.addr %s2173, 8
        %s2175 = scalar_lea.vmem %s12, %s2174
        // Predicated region
        $region97: #{bottleneck_lska_forward.1} parent=67 // pred_check
          %p2176 = pneg %p302
        $region98: #{bottleneck_lska_forward.1} parent=67 // pred_check_branch
          %2178 = sbr.rel (%p2176) target = $region100
        $region99: #{bottleneck_lska_forward.1} parent=67 // pred_region
          _
        $region100: #{bottleneck_lska_forward.1} parent=67 // pred_fallthru
          _
      $region68: #{bottleneck_lska_forward.1} parent=5 // pred_fallthru
        _
      %p2179 = scmp.le.s32.totalorder 2, %s22
      // Predicated region
      $region101: #{bottleneck_lska_forward.1} parent=5 // pred_check
        %p2180 = pneg %p2179
      $region102: #{bottleneck_lska_forward.1} parent=5 // pred_check_branch
        %2182 = sbr.rel (%p2180) target = $region104
      $region103: #{bottleneck_lska_forward.1} parent=5 // pred_region
        %s2183 = ssub.s32 %s22, 2
        // Predicated region
        $region105: #{bottleneck_lska_forward.1} parent=103 // pred_check
          %p2184 = pneg %p308
        $region106: #{bottleneck_lska_forward.1} parent=103 // pred_check_branch
          %2186 = sbr.rel (%p2184) target = $region108
        $region107: #{bottleneck_lska_forward.1} parent=103 // pred_region
          %p2187 = scmp.lt.s32.totalorder %s28, 1
          %s2188 = scalar_select %p2187, %s28, 1
          %s2189 = smul.addr %s2188, 4
          %s2190 = smul.addr %s2189, 8
          %s2191 = scalar_lea.vmem %s12, %s2190
        $region108: #{bottleneck_lska_forward.1} parent=103 // pred_fallthru
          _
      $region104: #{bottleneck_lska_forward.1} parent=5 // pred_fallthru
        _
    $region6: #{bottleneck_lska_forward.1} parent=1 // loop_footer
      %s26 = sadd.s32 1, %s22
    $region7: #{bottleneck_lska_forward.1} parent=1 // loop_footer_branch
      %21 = sbr.rel target = $region3
    $region8: #{bottleneck_lska_forward.1} parent=1 // loop_exit
      _
    %2192 = vsyncpa [#allocation3], 1
    %s2193 = scalar_lea.sflag [#allocation3], 1
    %2194 = vsyncpa %s2193, 1
    %2195 = vsyncpa [#allocation5], 1
    %2196 = vsyncpa [#allocation8], 1
    %2197 = vsyncpa [#allocation11], 1

</llo_original>
